<compile_context>
chip_gen: v7x
topology: tpu7x:2x2x1
jax: 0.10.0
libtpu: 0.0.40
codegen_flags: <defaults>
</compile_context>

<pallas_src>
import functools

import jax
import jax.numpy as jnp
from jax import lax
from jax.experimental import pallas as pl
from jax.experimental.pallas import tpu as pltpu


def _psgd_kernel(x_ref, y_ref, xv_ref, yv_ref, w0_ref,
                 sel_ref, err_ref,
                 w_scr, minerr_scr, minw_scr,
                 *, beta: float, cluster_size: int, t_chunk: int,
                 num_iter: int, mask_tail: bool):
    c = pl.program_id(0)
    num_c = pl.num_programs(0)

    # ---- init (chunk 0): load init weights, min_error = 1, selector_list = 0 ----
    @pl.when(c == 0)
    def _():
        w_scr[...] = w0_ref[...].astype(jnp.float32)
        minerr_scr[...] = jnp.ones_like(minerr_scr)
        minw_scr[...] = jnp.zeros_like(minw_scr)

    # ---- chunk-invariant validation data: load/cast once, reuse across iterations ----
    xv = xv_ref[...].astype(jnp.float32)                 # [V, D]
    # yv in {-1, +1}: "accepted AND misclassified" == (score > 0 AND yv < 0)
    yv_neg = (yv_ref[...] < 0.0).astype(jnp.float32)     # [1, V]

    bsz = x_ref.shape[1]
    scale = beta / bsz
    base_t = c * t_chunk

    def body(t, carry):
        w, minerr, minw = carry                          # [S,D], [S,1], [S,D]
        x = x_ref[t].astype(jnp.float32)                 # [B, D]
        y = y_ref[t].astype(jnp.float32)                 # [B, 1]

        # scores[b, s] = <x_b, w_s>   (MXU, f32 accumulate)
        scores = lax.dot_general(
            x, w, dimension_numbers=(((1,), (1,)), ((), ())),
            preferred_element_type=jnp.float32)          # [B, S]

        # perceptron surrogate: raw_g_s = sum_b 1[y_b * score_bs <= 0] * y_b * x_b
        m = jnp.where(y * scores <= 0.0, y, 0.0)         # [B, S]
        raw_g = lax.dot_general(
            m, x, dimension_numbers=(((0,), (0,)), ((), ())),
            preferred_element_type=jnp.float32)          # [S, D]

        # g = -(1/B) * raw_g ;  w - beta*(g - (g.w)w) == w + (beta/B)*(raw_g - (raw_g.w)w)
        gw = jnp.sum(raw_g * w, axis=-1, keepdims=True)  # [S, 1]
        w_new = w + scale * (raw_g - gw * w)

        # project back onto the unit sphere (EUP rsqrt instead of sqrt + divide)
        ss = jnp.sum(w_new * w_new, axis=-1, keepdims=True)
        w_new = w_new * lax.rsqrt(jnp.maximum(ss, 1e-12))

        # conditional error on the full validation set:
        #   err_s = P(y == -1 | <w_s, x> > 0), and 1.0 if nothing is accepted.
        sv = lax.dot_general(
            w_new, xv, dimension_numbers=(((1,), (1,)), ((), ())),
            preferred_element_type=jnp.float32)          # [S, V]
        acc = sv > 0.0
        num = jnp.sum(jnp.where(acc, yv_neg, 0.0), axis=-1, keepdims=True)  # [S, 1]
        den = jnp.sum(acc.astype(jnp.float32), axis=-1, keepdims=True)      # [S, 1]
        inv_den = pl.reciprocal(jnp.maximum(den, 1.0), approx=True)
        cond_err = jnp.where(den > 0.0, num * inv_den, 1.0)                 # [S, 1]

        # pairwise_update: keep per-selector argmin over iterations
        if mask_tail:
            valid = (base_t + t) < num_iter
            better = (cond_err < minerr) & valid
            w = jnp.where(valid, w_new, w)
        else:
            better = cond_err < minerr
            w = w_new
        minerr = jnp.where(better, cond_err, minerr)
        minw = jnp.where(better, w_new, minw)
        return w, minerr, minw

    init = (w_scr[...], minerr_scr[...], minw_scr[...])
    if t_chunk <= 8:
        w, minerr, minw = lax.fori_loop(0, t_chunk, body, init, unroll=True)
    else:
        w, minerr, minw = lax.fori_loop(0, t_chunk, body, init)
    w_scr[...] = w
    minerr_scr[...] = minerr
    minw_scr[...] = minw

    # ---- finalize (last chunk): pairwise_update between +w and -w halves ----
    @pl.when(c == num_c - 1)
    def _():
        cs = cluster_size
        e0 = minerr_scr[0:cs, :]
        e1 = minerr_scr[cs:2 * cs, :]
        w0 = minw_scr[0:cs, :]
        w1 = minw_scr[cs:2 * cs, :]
        pick0 = e0 < e1
        err_ref[...] = jnp.where(pick0, e0, e1)
        sel_ref[...] = jnp.where(pick0, w0, w1)


def selector_perceptron_forward(x_train, y_train, x_val, y_val, init_weight,
                                *, cluster_size: int, beta: float,
                                max_iter_chunk: int = 1024,
                                chunk_vmem_budget_bytes: int = 4 << 20):
    """Glue: parameter setup + pallas_call. Heavy compute lives in the kernel."""
    T, B, D = x_train.shape
    V = x_val.shape[0]
    C = cluster_size
    S = 2 * C

    # Chunk the SGD iterations: one grid step per chunk, fori_loop inside.
    # Chunk size is capped by a VMEM budget for the (double-buffered) training
    # chunk so the kernel is safe on v7x's smaller VMEM as well.
    bytes_per_iter = B * (D + 1) * 4
    budget_chunk = max(1, chunk_vmem_budget_bytes // bytes_per_iter)
    t_chunk = min(T, max_iter_chunk, budget_chunk)
    num_chunks = -(-T // t_chunk)
    T_pad = num_chunks * t_chunk
    mask_tail = T_pad != T
    if mask_tail:
        x_train = jnp.pad(x_train, ((0, T_pad - T), (0, 0), (0, 0)))
        y_train = jnp.pad(y_train, ((0, T_pad - T), (0, 0), (0, 0)))

    # init_weight.repeat(cluster_size, 1); stack([w, -w]) -> [2, C, D] -> [S, D]
    w_rep = jnp.broadcast_to(init_weight.reshape(1, D), (C, D))
    w_init = jnp.concatenate([w_rep, -w_rep], axis=0).astype(jnp.float32)  # [S, D]

    kernel = functools.partial(
        _psgd_kernel, beta=float(beta), cluster_size=C,
        t_chunk=t_chunk, num_iter=T, mask_tail=mask_tail)

    sel, err = pl.pallas_call(
        kernel,
        out_shape=(
            jax.ShapeDtypeStruct((C, D), jnp.float32),   # selector_list
            jax.ShapeDtypeStruct((C, 1), jnp.float32),   # min_error
        ),
        grid_spec=pltpu.PrefetchScalarGridSpec(
            num_scalar_prefetch=0,
            grid=(num_chunks,),
            in_specs=[
                pl.BlockSpec((t_chunk, B, D), lambda c: (c, 0, 0)),  # x_train chunk
                pl.BlockSpec((t_chunk, B, 1), lambda c: (c, 0, 0)),  # y_train chunk
                pl.BlockSpec((V, D), lambda c: (0, 0)),              # x_val (resident)
                pl.BlockSpec((1, V), lambda c: (0, 0)),              # y_val (resident)
                pl.BlockSpec((S, D), lambda c: (0, 0)),              # init weights
            ],
            out_specs=[
                pl.BlockSpec((C, D), lambda c: (0, 0)),
                pl.BlockSpec((C, 1), lambda c: (0, 0)),
            ],
            scratch_shapes=[
                pltpu.VMEM((S, D), jnp.float32),   # current weights (carried over chunks)
                pltpu.VMEM((S, 1), jnp.float32),   # min_error
                pltpu.VMEM((S, D), jnp.float32),   # selector_list (argmin weights)
            ],
        ),
        compiler_params=pltpu.CompilerParams(
            dimension_semantics=("arbitrary",),    # sequential SGD iteration chunks
        ),
    )(x_train, y_train, x_val, y_val, w_init)
    return sel, err


if __name__ == "__main__":
    key = jax.random.PRNGKey(0)
    k1, k2, k3, k4, k5 = jax.random.split(key, 5)

    dim_sample = 32      # D
    cluster_size = 8     # C
    num_iter = 4         # T
    batch_size = 16      # B
    val_size = 64        # V
    lr_beta = 0.05

    x_train = jax.random.normal(k1, (num_iter, batch_size, dim_sample), jnp.float32)
    y_train = jnp.where(jax.random.normal(k2, (num_iter, batch_size, 1)) >= 0.0,
                        1.0, -1.0).astype(jnp.float32)
    x_val = jax.random.normal(k3, (val_size, dim_sample), jnp.float32)
    y_val = jnp.where(jax.random.normal(k4, (1, val_size)) >= 0.0,
                      1.0, -1.0).astype(jnp.float32)

    init_weight = jax.random.normal(k5, (dim_sample,), jnp.float32)
    init_weight = init_weight / jnp.linalg.norm(init_weight)

    sel, err = selector_perceptron_forward(
        x_train, y_train, x_val, y_val, init_weight,
        cluster_size=cluster_size, beta=lr_beta)
    jax.block_until_ready(sel)
    jax.block_until_ready(err)

    assert sel.shape == (cluster_size, dim_sample)
    assert err.shape == (cluster_size, 1)
    assert bool(jnp.all(jnp.isfinite(sel))) and bool(jnp.all(jnp.isfinite(err)))
    print("KERNEL_OK")
</pallas_src>

<mosaic_0001>
module attributes {stable_mosaic.version = 11 : i64} {
  func.func @_psgd_kernel(%arg0: i32, %arg1: memref<4x16x32xf32, #tpu.memory_space<vmem>>, %arg2: memref<4x16x1xf32, #tpu.memory_space<vmem>>, %arg3: memref<64x32xf32, #tpu.memory_space<vmem>>, %arg4: memref<1x64xf32, #tpu.memory_space<vmem>>, %arg5: memref<16x32xf32, #tpu.memory_space<vmem>>, %arg6: memref<8x32xf32, #tpu.memory_space<vmem>>, %arg7: memref<8x1xf32, #tpu.memory_space<vmem>>, %arg8: memref<16x32xf32, #tpu.memory_space<vmem>>, %arg9: memref<16x1xf32, #tpu.memory_space<vmem>>, %arg10: memref<16x32xf32, #tpu.memory_space<vmem>>) attributes {dimension_semantics = [#tpu.dimension_semantics<arbitrary>], iteration_bounds = array<i64: 1>, scalar_prefetch = 0 : i64, scratch_operands = 3 : i64, tpu.core_type = #tpu.core_type<tc>, window_params = [{transform_indices = @transform_0, window_bounds = array<i64: 4, 16, 32>}, {transform_indices = @transform_1, window_bounds = array<i64: 4, 16, 1>}, {pipeline_mode = #tpu.pipeline_mode<synchronous>, transform_indices = @transform_2, window_bounds = array<i64: 64, 32>}, {pipeline_mode = #tpu.pipeline_mode<synchronous>, transform_indices = @transform_3, window_bounds = array<i64: 1, 64>}, {pipeline_mode = #tpu.pipeline_mode<synchronous>, transform_indices = @transform_4, window_bounds = array<i64: 16, 32>}, {pipeline_mode = #tpu.pipeline_mode<synchronous>, transform_indices = @transform_5, window_bounds = array<i64: 8, 32>}, {pipeline_mode = #tpu.pipeline_mode<synchronous>, transform_indices = @transform_6, window_bounds = array<i64: 8, 1>}]} {
    %c0_i32 = arith.constant 0 : i32
    %0 = arith.cmpi eq, %arg0, %c0_i32 : i32
    %1 = arith.extui %0 : i1 to i32
    %c0_i32_0 = arith.constant 0 : i32
    %2 = arith.cmpi ne, %1, %c0_i32_0 : i32
    scf.if %2 {
      %c0_99 = arith.constant 0 : index
      %c0_100 = arith.constant 0 : index
      %254 = vector.load %arg5[%c0_99, %c0_100] : memref<16x32xf32, #tpu.memory_space<vmem>>, vector<16x32xf32>
      %c0_101 = arith.constant 0 : index
      %c0_102 = arith.constant 0 : index
      %255 = vector.load %arg8[%c0_101, %c0_102] : memref<16x32xf32, #tpu.memory_space<vmem>>, vector<16x32xf32>
      tpu.vector_store %arg8[%c0_101, %c0_102], %254 {strides = array<i32>} : memref<16x32xf32, #tpu.memory_space<vmem>>, vector<16x32xf32>,
      %cst_103 = arith.constant 1.000000e+00 : f32
      %256 = vector.broadcast %cst_103 : f32 to vector<16x1xf32>
      %c0_104 = arith.constant 0 : index
      %c0_105 = arith.constant 0 : index
      %257 = vector.load %arg9[%c0_104, %c0_105] : memref<16x1xf32, #tpu.memory_space<vmem>>, vector<16x1xf32>
      tpu.vector_store %arg9[%c0_104, %c0_105], %256 {strides = array<i32>} : memref<16x1xf32, #tpu.memory_space<vmem>>, vector<16x1xf32>,
      %cst_106 = arith.constant 0.000000e+00 : f32
      %258 = vector.broadcast %cst_106 : f32 to vector<16x32xf32>
      %c0_107 = arith.constant 0 : index
      %c0_108 = arith.constant 0 : index
      %259 = vector.load %arg10[%c0_107, %c0_108] : memref<16x32xf32, #tpu.memory_space<vmem>>, vector<16x32xf32>
      tpu.vector_store %arg10[%c0_107, %c0_108], %258 {strides = array<i32>} : memref<16x32xf32, #tpu.memory_space<vmem>>, vector<16x32xf32>,
    } else {
    }
    %c0 = arith.constant 0 : index
    %c0_1 = arith.constant 0 : index
    %3 = vector.load %arg3[%c0, %c0_1] : memref<64x32xf32, #tpu.memory_space<vmem>>, vector<64x32xf32>
    %c0_2 = arith.constant 0 : index
    %c0_3 = arith.constant 0 : index
    %4 = vector.load %arg4[%c0_2, %c0_3] : memref<1x64xf32, #tpu.memory_space<vmem>>, vector<1x64xf32>
    %cst = arith.constant 0.000000e+00 : f32
    %5 = vector.broadcast %cst : f32 to vector<1x64xf32>
    %6 = arith.cmpf olt, %4, %5 : vector<1x64xf32>
    %7 = arith.extui %6 : vector<1x64xi1> to vector<1x64xi32>
    %8 = arith.sitofp %7 : vector<1x64xi32> to vector<1x64xf32>
    %c0_4 = arith.constant 0 : index
    %c0_5 = arith.constant 0 : index
    %9 = vector.load %arg8[%c0_4, %c0_5] : memref<16x32xf32, #tpu.memory_space<vmem>>, vector<16x32xf32>
    %c0_6 = arith.constant 0 : index
    %c0_7 = arith.constant 0 : index
    %10 = vector.load %arg9[%c0_6, %c0_7] : memref<16x1xf32, #tpu.memory_space<vmem>>, vector<16x1xf32>
    %c0_8 = arith.constant 0 : index
    %c0_9 = arith.constant 0 : index
    %11 = vector.load %arg10[%c0_8, %c0_9] : memref<16x32xf32, #tpu.memory_space<vmem>>, vector<16x32xf32>
    %c0_i32_10 = arith.constant 0 : i32
    %12 = arith.index_cast %c0_i32_10 : i32 to index
    %c0_11 = arith.constant 0 : index
    %c0_12 = arith.constant 0 : index
    %13 = vector.load %arg1[%12, %c0_11, %c0_12] : memref<4x16x32xf32, #tpu.memory_space<vmem>>, vector<1x16x32xf32>
    %14 = vector.shape_cast %13 : vector<1x16x32xf32> to vector<16x32xf32>
    %15 = arith.index_cast %c0_i32_10 : i32 to index
    %c0_13 = arith.constant 0 : index
    %c0_14 = arith.constant 0 : index
    %16 = vector.load %arg2[%15, %c0_13, %c0_14] : memref<4x16x1xf32, #tpu.memory_space<vmem>>, vector<1x16x1xf32>
    %17 = vector.shape_cast %16 : vector<1x16x1xf32> to vector<16x1xf32>
    %cst_15 = arith.constant dense<0.000000e+00> : vector<16x16xf32>
    %18 = tpu.matmul %14, %9, %cst_15 {dimension_numbers = #tpu.dot_dimension_numbers<[1], [1], [0], [0], [0, 0, 1, 0], [], []>} : vector<16x32xf32>, vector<16x32xf32>, vector<16x16xf32> -> vector<16x16xf32>
    %19 = vector.broadcast %17 : vector<16x1xf32> to vector<16x16xf32>
    %20 = arith.mulf %19, %18 : vector<16x16xf32>
    %cst_16 = arith.constant 0.000000e+00 : f32
    %21 = vector.broadcast %cst_16 : f32 to vector<16x16xf32>
    %22 = arith.cmpf ole, %20, %21 : vector<16x16xf32>
    %cst_17 = arith.constant 0.000000e+00 : f32
    %23 = vector.shape_cast %17 : vector<16x1xf32> to vector<16x1xf32>
    %24 = vector.broadcast %23 : vector<16x1xf32> to vector<16x16xf32>
    %25 = vector.broadcast %cst_17 : f32 to vector<16x16xf32>
    %26 = arith.select %22, %24, %25 : vector<16x16xi1>, vector<16x16xf32>
    %cst_18 = arith.constant dense<0.000000e+00> : vector<16x32xf32>
    %27 = tpu.matmul %26, %14, %cst_18 {dimension_numbers = #tpu.dot_dimension_numbers<[0], [0], [1], [1], [0, 1, 1, 1], [], []>} : vector<16x16xf32>, vector<16x32xf32>, vector<16x32xf32> -> vector<16x32xf32>
    %28 = arith.mulf %27, %9 : vector<16x32xf32>
    %cst_19 = arith.constant dense<0.000000e+00> : vector<16xf32>
    %29 = vector.multi_reduction <add>, %28, %cst_19 [1] : vector<16x32xf32> to vector<16xf32>
    %30 = vector.shape_cast %29 : vector<16xf32> to vector<16x1xf32>
    %31 = vector.broadcast %30 : vector<16x1xf32> to vector<16x32xf32>
    %32 = arith.mulf %31, %9 : vector<16x32xf32>
    %33 = arith.subf %27, %32 : vector<16x32xf32>
    %cst_20 = arith.constant 3.125000e-03 : f32
    %34 = vector.broadcast %cst_20 : f32 to vector<16x32xf32>
    %35 = arith.mulf %34, %33 : vector<16x32xf32>
    %36 = arith.addf %9, %35 : vector<16x32xf32>
    %37 = arith.mulf %36, %36 : vector<16x32xf32>
    %cst_21 = arith.constant dense<0.000000e+00> : vector<16xf32>
    %38 = vector.multi_reduction <add>, %37, %cst_21 [1] : vector<16x32xf32> to vector<16xf32>
    %39 = vector.shape_cast %38 : vector<16xf32> to vector<16x1xf32>
    %cst_22 = arith.constant 9.99999996E-13 : f32
    %40 = vector.broadcast %cst_22 : f32 to vector<16x1xf32>
    %41 = arith.maximumf %39, %40 : vector<16x1xf32>
    %42 = math.rsqrt %41 : vector<16x1xf32>
    %43 = vector.broadcast %42 : vector<16x1xf32> to vector<16x32xf32>
    %44 = arith.mulf %36, %43 : vector<16x32xf32>
    %cst_23 = arith.constant dense<0.000000e+00> : vector<16x64xf32>
    %45 = tpu.matmul %44, %3, %cst_23 {dimension_numbers = #tpu.dot_dimension_numbers<[1], [1], [0], [0], [0, 0, 1, 0], [], []>} : vector<16x32xf32>, vector<64x32xf32>, vector<16x64xf32> -> vector<16x64xf32>
    %cst_24 = arith.constant 0.000000e+00 : f32
    %46 = vector.broadcast %cst_24 : f32 to vector<16x64xf32>
    %47 = arith.cmpf ogt, %45, %46 : vector<16x64xf32>
    %cst_25 = arith.constant 0.000000e+00 : f32
    %48 = vector.shape_cast %8 : vector<1x64xf32> to vector<1x64xf32>
    %49 = vector.broadcast %48 : vector<1x64xf32> to vector<16x64xf32>
    %50 = vector.broadcast %cst_25 : f32 to vector<16x64xf32>
    %51 = arith.select %47, %49, %50 : vector<16x64xi1>, vector<16x64xf32>
    %cst_26 = arith.constant dense<0.000000e+00> : vector<16xf32>
    %52 = vector.multi_reduction <add>, %51, %cst_26 [1] : vector<16x64xf32> to vector<16xf32>
    %53 = vector.shape_cast %52 : vector<16xf32> to vector<16x1xf32>
    %54 = arith.extui %47 : vector<16x64xi1> to vector<16x64xi32>
    %55 = arith.sitofp %54 : vector<16x64xi32> to vector<16x64xf32>
    %cst_27 = arith.constant dense<0.000000e+00> : vector<16xf32>
    %56 = vector.multi_reduction <add>, %55, %cst_27 [1] : vector<16x64xf32> to vector<16xf32>
    %57 = vector.shape_cast %56 : vector<16xf32> to vector<16x1xf32>
    %cst_28 = arith.constant 1.000000e+00 : f32
    %58 = vector.broadcast %cst_28 : f32 to vector<16x1xf32>
    %59 = arith.maximumf %57, %58 : vector<16x1xf32>
    %60 = tpu.reciprocal %59 {approx = true} : vector<16x1xf32> -> vector<16x1xf32>
    %cst_29 = arith.constant 0.000000e+00 : f32
    %61 = vector.broadcast %cst_29 : f32 to vector<16x1xf32>
    %62 = arith.cmpf ogt, %57, %61 : vector<16x1xf32>
    %63 = arith.mulf %53, %60 : vector<16x1xf32>
    %cst_30 = arith.constant 1.000000e+00 : f32
    %64 = vector.broadcast %cst_30 : f32 to vector<16x1xf32>
    %65 = arith.select %62, %63, %64 : vector<16x1xi1>, vector<16x1xf32>
    %66 = arith.cmpf olt, %65, %10 : vector<16x1xf32>
    %67 = arith.select %66, %65, %10 : vector<16x1xi1>, vector<16x1xf32>
    %68 = vector.shape_cast %66 : vector<16x1xi1> to vector<16x1xi1>
    %69 = vector.broadcast %68 : vector<16x1xi1> to vector<16x32xi1>
    %70 = arith.select %69, %44, %11 : vector<16x32xi1>, vector<16x32xf32>
    %c1_i32 = arith.constant 1 : i32
    %71 = arith.index_cast %c1_i32 : i32 to index
    %c0_31 = arith.constant 0 : index
    %c0_32 = arith.constant 0 : index
    %72 = vector.load %arg1[%71, %c0_31, %c0_32] : memref<4x16x32xf32, #tpu.memory_space<vmem>>, vector<1x16x32xf32>
    %73 = vector.shape_cast %72 : vector<1x16x32xf32> to vector<16x32xf32>
    %74 = arith.index_cast %c1_i32 : i32 to index
    %c0_33 = arith.constant 0 : index
    %c0_34 = arith.constant 0 : index
    %75 = vector.load %arg2[%74, %c0_33, %c0_34] : memref<4x16x1xf32, #tpu.memory_space<vmem>>, vector<1x16x1xf32>
    %76 = vector.shape_cast %75 : vector<1x16x1xf32> to vector<16x1xf32>
    %cst_35 = arith.constant dense<0.000000e+00> : vector<16x16xf32>
    %77 = tpu.matmul %73, %44, %cst_35 {dimension_numbers = #tpu.dot_dimension_numbers<[1], [1], [0], [0], [0, 0, 1, 0], [], []>} : vector<16x32xf32>, vector<16x32xf32>, vector<16x16xf32> -> vector<16x16xf32>
    %78 = vector.broadcast %76 : vector<16x1xf32> to vector<16x16xf32>
    %79 = arith.mulf %78, %77 : vector<16x16xf32>
    %cst_36 = arith.constant 0.000000e+00 : f32
    %80 = vector.broadcast %cst_36 : f32 to vector<16x16xf32>
    %81 = arith.cmpf ole, %79, %80 : vector<16x16xf32>
    %cst_37 = arith.constant 0.000000e+00 : f32
    %82 = vector.shape_cast %76 : vector<16x1xf32> to vector<16x1xf32>
    %83 = vector.broadcast %82 : vector<16x1xf32> to vector<16x16xf32>
    %84 = vector.broadcast %cst_37 : f32 to vector<16x16xf32>
    %85 = arith.select %81, %83, %84 : vector<16x16xi1>, vector<16x16xf32>
    %cst_38 = arith.constant dense<0.000000e+00> : vector<16x32xf32>
    %86 = tpu.matmul %85, %73, %cst_38 {dimension_numbers = #tpu.dot_dimension_numbers<[0], [0], [1], [1], [0, 1, 1, 1], [], []>} : vector<16x16xf32>, vector<16x32xf32>, vector<16x32xf32> -> vector<16x32xf32>
    %87 = arith.mulf %86, %44 : vector<16x32xf32>
    %cst_39 = arith.constant dense<0.000000e+00> : vector<16xf32>
    %88 = vector.multi_reduction <add>, %87, %cst_39 [1] : vector<16x32xf32> to vector<16xf32>
    %89 = vector.shape_cast %88 : vector<16xf32> to vector<16x1xf32>
    %90 = vector.broadcast %89 : vector<16x1xf32> to vector<16x32xf32>
    %91 = arith.mulf %90, %44 : vector<16x32xf32>
    %92 = arith.subf %86, %91 : vector<16x32xf32>
    %cst_40 = arith.constant 3.125000e-03 : f32
    %93 = vector.broadcast %cst_40 : f32 to vector<16x32xf32>
    %94 = arith.mulf %93, %92 : vector<16x32xf32>
    %95 = arith.addf %44, %94 : vector<16x32xf32>
    %96 = arith.mulf %95, %95 : vector<16x32xf32>
    %cst_41 = arith.constant dense<0.000000e+00> : vector<16xf32>
    %97 = vector.multi_reduction <add>, %96, %cst_41 [1] : vector<16x32xf32> to vector<16xf32>
    %98 = vector.shape_cast %97 : vector<16xf32> to vector<16x1xf32>
    %cst_42 = arith.constant 9.99999996E-13 : f32
    %99 = vector.broadcast %cst_42 : f32 to vector<16x1xf32>
    %100 = arith.maximumf %98, %99 : vector<16x1xf32>
    %101 = math.rsqrt %100 : vector<16x1xf32>
    %102 = vector.broadcast %101 : vector<16x1xf32> to vector<16x32xf32>
    %103 = arith.mulf %95, %102 : vector<16x32xf32>
    %cst_43 = arith.constant dense<0.000000e+00> : vector<16x64xf32>
    %104 = tpu.matmul %103, %3, %cst_43 {dimension_numbers = #tpu.dot_dimension_numbers<[1], [1], [0], [0], [0, 0, 1, 0], [], []>} : vector<16x32xf32>, vector<64x32xf32>, vector<16x64xf32> -> vector<16x64xf32>
    %cst_44 = arith.constant 0.000000e+00 : f32
    %105 = vector.broadcast %cst_44 : f32 to vector<16x64xf32>
    %106 = arith.cmpf ogt, %104, %105 : vector<16x64xf32>
    %cst_45 = arith.constant 0.000000e+00 : f32
    %107 = vector.shape_cast %8 : vector<1x64xf32> to vector<1x64xf32>
    %108 = vector.broadcast %107 : vector<1x64xf32> to vector<16x64xf32>
    %109 = vector.broadcast %cst_45 : f32 to vector<16x64xf32>
    %110 = arith.select %106, %108, %109 : vector<16x64xi1>, vector<16x64xf32>
    %cst_46 = arith.constant dense<0.000000e+00> : vector<16xf32>
    %111 = vector.multi_reduction <add>, %110, %cst_46 [1] : vector<16x64xf32> to vector<16xf32>
    %112 = vector.shape_cast %111 : vector<16xf32> to vector<16x1xf32>
    %113 = arith.extui %106 : vector<16x64xi1> to vector<16x64xi32>
    %114 = arith.sitofp %113 : vector<16x64xi32> to vector<16x64xf32>
    %cst_47 = arith.constant dense<0.000000e+00> : vector<16xf32>
    %115 = vector.multi_reduction <add>, %114, %cst_47 [1] : vector<16x64xf32> to vector<16xf32>
    %116 = vector.shape_cast %115 : vector<16xf32> to vector<16x1xf32>
    %cst_48 = arith.constant 1.000000e+00 : f32
    %117 = vector.broadcast %cst_48 : f32 to vector<16x1xf32>
    %118 = arith.maximumf %116, %117 : vector<16x1xf32>
    %119 = tpu.reciprocal %118 {approx = true} : vector<16x1xf32> -> vector<16x1xf32>
    %cst_49 = arith.constant 0.000000e+00 : f32
    %120 = vector.broadcast %cst_49 : f32 to vector<16x1xf32>
    %121 = arith.cmpf ogt, %116, %120 : vector<16x1xf32>
    %122 = arith.mulf %112, %119 : vector<16x1xf32>
    %cst_50 = arith.constant 1.000000e+00 : f32
    %123 = vector.broadcast %cst_50 : f32 to vector<16x1xf32>
    %124 = arith.select %121, %122, %123 : vector<16x1xi1>, vector<16x1xf32>
    %125 = arith.cmpf olt, %124, %67 : vector<16x1xf32>
    %126 = arith.select %125, %124, %67 : vector<16x1xi1>, vector<16x1xf32>
    %127 = vector.shape_cast %125 : vector<16x1xi1> to vector<16x1xi1>
    %128 = vector.broadcast %127 : vector<16x1xi1> to vector<16x32xi1>
    %129 = arith.select %128, %103, %70 : vector<16x32xi1>, vector<16x32xf32>
    %c2_i32 = arith.constant 2 : i32
    %130 = arith.index_cast %c2_i32 : i32 to index
    %c0_51 = arith.constant 0 : index
    %c0_52 = arith.constant 0 : index
    %131 = vector.load %arg1[%130, %c0_51, %c0_52] : memref<4x16x32xf32, #tpu.memory_space<vmem>>, vector<1x16x32xf32>
    %132 = vector.shape_cast %131 : vector<1x16x32xf32> to vector<16x32xf32>
    %133 = arith.index_cast %c2_i32 : i32 to index
    %c0_53 = arith.constant 0 : index
    %c0_54 = arith.constant 0 : index
    %134 = vector.load %arg2[%133, %c0_53, %c0_54] : memref<4x16x1xf32, #tpu.memory_space<vmem>>, vector<1x16x1xf32>
    %135 = vector.shape_cast %134 : vector<1x16x1xf32> to vector<16x1xf32>
    %cst_55 = arith.constant dense<0.000000e+00> : vector<16x16xf32>
    %136 = tpu.matmul %132, %103, %cst_55 {dimension_numbers = #tpu.dot_dimension_numbers<[1], [1], [0], [0], [0, 0, 1, 0], [], []>} : vector<16x32xf32>, vector<16x32xf32>, vector<16x16xf32> -> vector<16x16xf32>
    %137 = vector.broadcast %135 : vector<16x1xf32> to vector<16x16xf32>
    %138 = arith.mulf %137, %136 : vector<16x16xf32>
    %cst_56 = arith.constant 0.000000e+00 : f32
    %139 = vector.broadcast %cst_56 : f32 to vector<16x16xf32>
    %140 = arith.cmpf ole, %138, %139 : vector<16x16xf32>
    %cst_57 = arith.constant 0.000000e+00 : f32
    %141 = vector.shape_cast %135 : vector<16x1xf32> to vector<16x1xf32>
    %142 = vector.broadcast %141 : vector<16x1xf32> to vector<16x16xf32>
    %143 = vector.broadcast %cst_57 : f32 to vector<16x16xf32>
    %144 = arith.select %140, %142, %143 : vector<16x16xi1>, vector<16x16xf32>
    %cst_58 = arith.constant dense<0.000000e+00> : vector<16x32xf32>
    %145 = tpu.matmul %144, %132, %cst_58 {dimension_numbers = #tpu.dot_dimension_numbers<[0], [0], [1], [1], [0, 1, 1, 1], [], []>} : vector<16x16xf32>, vector<16x32xf32>, vector<16x32xf32> -> vector<16x32xf32>
    %146 = arith.mulf %145, %103 : vector<16x32xf32>
    %cst_59 = arith.constant dense<0.000000e+00> : vector<16xf32>
    %147 = vector.multi_reduction <add>, %146, %cst_59 [1] : vector<16x32xf32> to vector<16xf32>
    %148 = vector.shape_cast %147 : vector<16xf32> to vector<16x1xf32>
    %149 = vector.broadcast %148 : vector<16x1xf32> to vector<16x32xf32>
    %150 = arith.mulf %149, %103 : vector<16x32xf32>
    %151 = arith.subf %145, %150 : vector<16x32xf32>
    %cst_60 = arith.constant 3.125000e-03 : f32
    %152 = vector.broadcast %cst_60 : f32 to vector<16x32xf32>
    %153 = arith.mulf %152, %151 : vector<16x32xf32>
    %154 = arith.addf %103, %153 : vector<16x32xf32>
    %155 = arith.mulf %154, %154 : vector<16x32xf32>
    %cst_61 = arith.constant dense<0.000000e+00> : vector<16xf32>
    %156 = vector.multi_reduction <add>, %155, %cst_61 [1] : vector<16x32xf32> to vector<16xf32>
    %157 = vector.shape_cast %156 : vector<16xf32> to vector<16x1xf32>
    %cst_62 = arith.constant 9.99999996E-13 : f32
    %158 = vector.broadcast %cst_62 : f32 to vector<16x1xf32>
    %159 = arith.maximumf %157, %158 : vector<16x1xf32>
    %160 = math.rsqrt %159 : vector<16x1xf32>
    %161 = vector.broadcast %160 : vector<16x1xf32> to vector<16x32xf32>
    %162 = arith.mulf %154, %161 : vector<16x32xf32>
    %cst_63 = arith.constant dense<0.000000e+00> : vector<16x64xf32>
    %163 = tpu.matmul %162, %3, %cst_63 {dimension_numbers = #tpu.dot_dimension_numbers<[1], [1], [0], [0], [0, 0, 1, 0], [], []>} : vector<16x32xf32>, vector<64x32xf32>, vector<16x64xf32> -> vector<16x64xf32>
    %cst_64 = arith.constant 0.000000e+00 : f32
    %164 = vector.broadcast %cst_64 : f32 to vector<16x64xf32>
    %165 = arith.cmpf ogt, %163, %164 : vector<16x64xf32>
    %cst_65 = arith.constant 0.000000e+00 : f32
    %166 = vector.shape_cast %8 : vector<1x64xf32> to vector<1x64xf32>
    %167 = vector.broadcast %166 : vector<1x64xf32> to vector<16x64xf32>
    %168 = vector.broadcast %cst_65 : f32 to vector<16x64xf32>
    %169 = arith.select %165, %167, %168 : vector<16x64xi1>, vector<16x64xf32>
    %cst_66 = arith.constant dense<0.000000e+00> : vector<16xf32>
    %170 = vector.multi_reduction <add>, %169, %cst_66 [1] : vector<16x64xf32> to vector<16xf32>
    %171 = vector.shape_cast %170 : vector<16xf32> to vector<16x1xf32>
    %172 = arith.extui %165 : vector<16x64xi1> to vector<16x64xi32>
    %173 = arith.sitofp %172 : vector<16x64xi32> to vector<16x64xf32>
    %cst_67 = arith.constant dense<0.000000e+00> : vector<16xf32>
    %174 = vector.multi_reduction <add>, %173, %cst_67 [1] : vector<16x64xf32> to vector<16xf32>
    %175 = vector.shape_cast %174 : vector<16xf32> to vector<16x1xf32>
    %cst_68 = arith.constant 1.000000e+00 : f32
    %176 = vector.broadcast %cst_68 : f32 to vector<16x1xf32>
    %177 = arith.maximumf %175, %176 : vector<16x1xf32>
    %178 = tpu.reciprocal %177 {approx = true} : vector<16x1xf32> -> vector<16x1xf32>
    %cst_69 = arith.constant 0.000000e+00 : f32
    %179 = vector.broadcast %cst_69 : f32 to vector<16x1xf32>
    %180 = arith.cmpf ogt, %175, %179 : vector<16x1xf32>
    %181 = arith.mulf %171, %178 : vector<16x1xf32>
    %cst_70 = arith.constant 1.000000e+00 : f32
    %182 = vector.broadcast %cst_70 : f32 to vector<16x1xf32>
    %183 = arith.select %180, %181, %182 : vector<16x1xi1>, vector<16x1xf32>
    %184 = arith.cmpf olt, %183, %126 : vector<16x1xf32>
    %185 = arith.select %184, %183, %126 : vector<16x1xi1>, vector<16x1xf32>
    %186 = vector.shape_cast %184 : vector<16x1xi1> to vector<16x1xi1>
    %187 = vector.broadcast %186 : vector<16x1xi1> to vector<16x32xi1>
    %188 = arith.select %187, %162, %129 : vector<16x32xi1>, vector<16x32xf32>
    %c3_i32 = arith.constant 3 : i32
    %189 = arith.index_cast %c3_i32 : i32 to index
    %c0_71 = arith.constant 0 : index
    %c0_72 = arith.constant 0 : index
    %190 = vector.load %arg1[%189, %c0_71, %c0_72] : memref<4x16x32xf32, #tpu.memory_space<vmem>>, vector<1x16x32xf32>
    %191 = vector.shape_cast %190 : vector<1x16x32xf32> to vector<16x32xf32>
    %192 = arith.index_cast %c3_i32 : i32 to index
    %c0_73 = arith.constant 0 : index
    %c0_74 = arith.constant 0 : index
    %193 = vector.load %arg2[%192, %c0_73, %c0_74] : memref<4x16x1xf32, #tpu.memory_space<vmem>>, vector<1x16x1xf32>
    %194 = vector.shape_cast %193 : vector<1x16x1xf32> to vector<16x1xf32>
    %cst_75 = arith.constant dense<0.000000e+00> : vector<16x16xf32>
    %195 = tpu.matmul %191, %162, %cst_75 {dimension_numbers = #tpu.dot_dimension_numbers<[1], [1], [0], [0], [0, 0, 1, 0], [], []>} : vector<16x32xf32>, vector<16x32xf32>, vector<16x16xf32> -> vector<16x16xf32>
    %196 = vector.broadcast %194 : vector<16x1xf32> to vector<16x16xf32>
    %197 = arith.mulf %196, %195 : vector<16x16xf32>
    %cst_76 = arith.constant 0.000000e+00 : f32
    %198 = vector.broadcast %cst_76 : f32 to vector<16x16xf32>
    %199 = arith.cmpf ole, %197, %198 : vector<16x16xf32>
    %cst_77 = arith.constant 0.000000e+00 : f32
    %200 = vector.shape_cast %194 : vector<16x1xf32> to vector<16x1xf32>
    %201 = vector.broadcast %200 : vector<16x1xf32> to vector<16x16xf32>
    %202 = vector.broadcast %cst_77 : f32 to vector<16x16xf32>
    %203 = arith.select %199, %201, %202 : vector<16x16xi1>, vector<16x16xf32>
    %cst_78 = arith.constant dense<0.000000e+00> : vector<16x32xf32>
    %204 = tpu.matmul %203, %191, %cst_78 {dimension_numbers = #tpu.dot_dimension_numbers<[0], [0], [1], [1], [0, 1, 1, 1], [], []>} : vector<16x16xf32>, vector<16x32xf32>, vector<16x32xf32> -> vector<16x32xf32>
    %205 = arith.mulf %204, %162 : vector<16x32xf32>
    %cst_79 = arith.constant dense<0.000000e+00> : vector<16xf32>
    %206 = vector.multi_reduction <add>, %205, %cst_79 [1] : vector<16x32xf32> to vector<16xf32>
    %207 = vector.shape_cast %206 : vector<16xf32> to vector<16x1xf32>
    %208 = vector.broadcast %207 : vector<16x1xf32> to vector<16x32xf32>
    %209 = arith.mulf %208, %162 : vector<16x32xf32>
    %210 = arith.subf %204, %209 : vector<16x32xf32>
    %cst_80 = arith.constant 3.125000e-03 : f32
    %211 = vector.broadcast %cst_80 : f32 to vector<16x32xf32>
    %212 = arith.mulf %211, %210 : vector<16x32xf32>
    %213 = arith.addf %162, %212 : vector<16x32xf32>
    %214 = arith.mulf %213, %213 : vector<16x32xf32>
    %cst_81 = arith.constant dense<0.000000e+00> : vector<16xf32>
    %215 = vector.multi_reduction <add>, %214, %cst_81 [1] : vector<16x32xf32> to vector<16xf32>
    %216 = vector.shape_cast %215 : vector<16xf32> to vector<16x1xf32>
    %cst_82 = arith.constant 9.99999996E-13 : f32
    %217 = vector.broadcast %cst_82 : f32 to vector<16x1xf32>
    %218 = arith.maximumf %216, %217 : vector<16x1xf32>
    %219 = math.rsqrt %218 : vector<16x1xf32>
    %220 = vector.broadcast %219 : vector<16x1xf32> to vector<16x32xf32>
    %221 = arith.mulf %213, %220 : vector<16x32xf32>
    %cst_83 = arith.constant dense<0.000000e+00> : vector<16x64xf32>
    %222 = tpu.matmul %221, %3, %cst_83 {dimension_numbers = #tpu.dot_dimension_numbers<[1], [1], [0], [0], [0, 0, 1, 0], [], []>} : vector<16x32xf32>, vector<64x32xf32>, vector<16x64xf32> -> vector<16x64xf32>
    %cst_84 = arith.constant 0.000000e+00 : f32
    %223 = vector.broadcast %cst_84 : f32 to vector<16x64xf32>
    %224 = arith.cmpf ogt, %222, %223 : vector<16x64xf32>
    %cst_85 = arith.constant 0.000000e+00 : f32
    %225 = vector.shape_cast %8 : vector<1x64xf32> to vector<1x64xf32>
    %226 = vector.broadcast %225 : vector<1x64xf32> to vector<16x64xf32>
    %227 = vector.broadcast %cst_85 : f32 to vector<16x64xf32>
    %228 = arith.select %224, %226, %227 : vector<16x64xi1>, vector<16x64xf32>
    %cst_86 = arith.constant dense<0.000000e+00> : vector<16xf32>
    %229 = vector.multi_reduction <add>, %228, %cst_86 [1] : vector<16x64xf32> to vector<16xf32>
    %230 = vector.shape_cast %229 : vector<16xf32> to vector<16x1xf32>
    %231 = arith.extui %224 : vector<16x64xi1> to vector<16x64xi32>
    %232 = arith.sitofp %231 : vector<16x64xi32> to vector<16x64xf32>
    %cst_87 = arith.constant dense<0.000000e+00> : vector<16xf32>
    %233 = vector.multi_reduction <add>, %232, %cst_87 [1] : vector<16x64xf32> to vector<16xf32>
    %234 = vector.shape_cast %233 : vector<16xf32> to vector<16x1xf32>
    %cst_88 = arith.constant 1.000000e+00 : f32
    %235 = vector.broadcast %cst_88 : f32 to vector<16x1xf32>
    %236 = arith.maximumf %234, %235 : vector<16x1xf32>
    %237 = tpu.reciprocal %236 {approx = true} : vector<16x1xf32> -> vector<16x1xf32>
    %cst_89 = arith.constant 0.000000e+00 : f32
    %238 = vector.broadcast %cst_89 : f32 to vector<16x1xf32>
    %239 = arith.cmpf ogt, %234, %238 : vector<16x1xf32>
    %240 = arith.mulf %230, %237 : vector<16x1xf32>
    %cst_90 = arith.constant 1.000000e+00 : f32
    %241 = vector.broadcast %cst_90 : f32 to vector<16x1xf32>
    %242 = arith.select %239, %240, %241 : vector<16x1xi1>, vector<16x1xf32>
    %243 = arith.cmpf olt, %242, %185 : vector<16x1xf32>
    %244 = arith.select %243, %242, %185 : vector<16x1xi1>, vector<16x1xf32>
    %245 = vector.shape_cast %243 : vector<16x1xi1> to vector<16x1xi1>
    %246 = vector.broadcast %245 : vector<16x1xi1> to vector<16x32xi1>
    %247 = arith.select %246, %221, %188 : vector<16x32xi1>, vector<16x32xf32>
    %c4_i32 = arith.constant 4 : i32
    %c0_91 = arith.constant 0 : index
    %c0_92 = arith.constant 0 : index
    %248 = vector.load %arg8[%c0_91, %c0_92] : memref<16x32xf32, #tpu.memory_space<vmem>>, vector<16x32xf32>
    tpu.vector_store %arg8[%c0_91, %c0_92], %221 {strides = array<i32>} : memref<16x32xf32, #tpu.memory_space<vmem>>, vector<16x32xf32>,
    %c0_93 = arith.constant 0 : index
    %c0_94 = arith.constant 0 : index
    %249 = vector.load %arg9[%c0_93, %c0_94] : memref<16x1xf32, #tpu.memory_space<vmem>>, vector<16x1xf32>
    tpu.vector_store %arg9[%c0_93, %c0_94], %244 {strides = array<i32>} : memref<16x1xf32, #tpu.memory_space<vmem>>, vector<16x1xf32>,
    %c0_95 = arith.constant 0 : index
    %c0_96 = arith.constant 0 : index
    %250 = vector.load %arg10[%c0_95, %c0_96] : memref<16x32xf32, #tpu.memory_space<vmem>>, vector<16x32xf32>
    tpu.vector_store %arg10[%c0_95, %c0_96], %247 {strides = array<i32>} : memref<16x32xf32, #tpu.memory_space<vmem>>, vector<16x32xf32>,
    %c0_i32_97 = arith.constant 0 : i32
    %251 = arith.cmpi eq, %arg0, %c0_i32_97 : i32
    %252 = arith.extui %251 : i1 to i32
    %c0_i32_98 = arith.constant 0 : i32
    %253 = arith.cmpi ne, %252, %c0_i32_98 : i32
    scf.if %253 {
      %c0_99 = arith.constant 0 : index
      %c0_100 = arith.constant 0 : index
      %254 = vector.load %arg9[%c0_99, %c0_100] : memref<16x1xf32, #tpu.memory_space<vmem>>, vector<8x1xf32>
      %c8 = arith.constant 8 : index
      %c0_101 = arith.constant 0 : index
      %255 = vector.load %arg9[%c8, %c0_101] : memref<16x1xf32, #tpu.memory_space<vmem>>, vector<8x1xf32>
      %c0_102 = arith.constant 0 : index
      %c0_103 = arith.constant 0 : index
      %256 = vector.load %arg10[%c0_102, %c0_103] : memref<16x32xf32, #tpu.memory_space<vmem>>, vector<8x32xf32>
      %c8_104 = arith.constant 8 : index
      %c0_105 = arith.constant 0 : index
      %257 = vector.load %arg10[%c8_104, %c0_105] : memref<16x32xf32, #tpu.memory_space<vmem>>, vector<8x32xf32>
      %258 = arith.cmpf olt, %254, %255 : vector<8x1xf32>
      %259 = arith.select %258, %254, %255 : vector<8x1xi1>, vector<8x1xf32>
      %c0_106 = arith.constant 0 : index
      %c0_107 = arith.constant 0 : index
      %260 = vector.load %arg7[%c0_106, %c0_107] : memref<8x1xf32, #tpu.memory_space<vmem>>, vector<8x1xf32>
      tpu.vector_store %arg7[%c0_106, %c0_107], %259 {strides = array<i32>} : memref<8x1xf32, #tpu.memory_space<vmem>>, vector<8x1xf32>,
      %261 = vector.shape_cast %258 : vector<8x1xi1> to vector<8x1xi1>
      %262 = vector.broadcast %261 : vector<8x1xi1> to vector<8x32xi1>
      %263 = arith.select %262, %256, %257 : vector<8x32xi1>, vector<8x32xf32>
      %c0_108 = arith.constant 0 : index
      %c0_109 = arith.constant 0 : index
      %264 = vector.load %arg6[%c0_108, %c0_109] : memref<8x32xf32, #tpu.memory_space<vmem>>, vector<8x32xf32>
      tpu.vector_store %arg6[%c0_108, %c0_109], %263 {strides = array<i32>} : memref<8x32xf32, #tpu.memory_space<vmem>>, vector<8x32xf32>,
    } else {
    }
    return
  }
  func.func @transform_0(%arg0: i32) -> (i32, i32, i32) {
    %c0_i32 = arith.constant 0 : i32
    %c0_i32_0 = arith.constant 0 : i32
    %c0_i32_1 = arith.constant 0 : i32
    return %arg0, %c0_i32, %c0_i32_0 : i32, i32, i32
  }
  func.func @transform_1(%arg0: i32) -> (i32, i32, i32) {
    %c0_i32 = arith.constant 0 : i32
    %c0_i32_0 = arith.constant 0 : i32
    %c0_i32_1 = arith.constant 0 : i32
    return %arg0, %c0_i32, %c0_i32_0 : i32, i32, i32
  }
  func.func @transform_2(%arg0: i32) -> (i32, i32) {
    %c0_i32 = arith.constant 0 : i32
    %c0_i32_0 = arith.constant 0 : i32
    %c0_i32_1 = arith.constant 0 : i32
    return %c0_i32, %c0_i32_0 : i32, i32
  }
  func.func @transform_3(%arg0: i32) -> (i32, i32) {
    %c0_i32 = arith.constant 0 : i32
    %c0_i32_0 = arith.constant 0 : i32
    %c0_i32_1 = arith.constant 0 : i32
    return %c0_i32, %c0_i32_0 : i32, i32
  }
  func.func @transform_4(%arg0: i32) -> (i32, i32) {
    %c0_i32 = arith.constant 0 : i32
    %c0_i32_0 = arith.constant 0 : i32
    %c0_i32_1 = arith.constant 0 : i32
    return %c0_i32, %c0_i32_0 : i32, i32
  }
  func.func @transform_5(%arg0: i32) -> (i32, i32) {
    %c0_i32 = arith.constant 0 : i32
    %c0_i32_0 = arith.constant 0 : i32
    %c0_i32_1 = arith.constant 0 : i32
    return %c0_i32, %c0_i32_0 : i32, i32
  }
  func.func @transform_6(%arg0: i32) -> (i32, i32) {
    %c0_i32 = arith.constant 0 : i32
    %c0_i32_0 = arith.constant 0 : i32
    %c0_i32_1 = arith.constant 0 : i32
    return %c0_i32, %c0_i32_0 : i32, i32
  }
}

</mosaic_0001>

<llo_original>
// kernel: tpu_custom_call.1
$region0: #{tpu_custom_call.1}
  #allocation0 [shape = 'u32[]', space=smem, size = 0x4, offset = 0x4, fixed_abs, tag = 'smem constant byte address 0x4 - core index']
  #allocation1 [shape = 'u32[144,128]{1,0:T(1,128)}', space=vmem, size = 0x12000, scoped, tag = 'internal scratch']
  #allocation2 [shape = 'f32[16,32]{1,0:T(8,128)}', space=vmem, size = 0x2000, scoped, tag = 'scratch operand']
  #allocation3 [shape = 'f32[16,1]{1,0:T(8,128)}', space=vmem, size = 0x2000, scoped, tag = 'scratch operand']
  #allocation4 [shape = 'f32[16,32]{1,0:T(8,128)}', space=vmem, size = 0x2000, scoped, tag = 'scratch operand']
  %s0 = inlined_call_operand.vmem [shape: f32[4,16,32], index: 0, kind: input, shape index: {}]
  %s1 = inlined_call_operand.vmem [shape: f32[4,16,1], index: 1, kind: input, shape index: {}]
  %s2 = inlined_call_operand.vmem [shape: f32[64,32], index: 2, kind: input, shape index: {}]
  %s3 = inlined_call_operand.vmem [shape: f32[1,64], index: 3, kind: input, shape index: {}]
  %s4 = inlined_call_operand.vmem [shape: f32[16,32], index: 4, kind: input, shape index: {}]
  %s5 = inlined_call_operand.hbm [shape: f32[8,32], index: 5, kind: output, shape index: {0}]
  %s6 = inlined_call_operand.vmem [shape: f32[8,1], index: 6, kind: output, shape index: {1}]
  %7 = xla_tuple %s5, %s6
  %s8 = sld [smem:[#allocation0]]
  $region46: #{tpu_custom_call.1} parent=0
    _
  %s10 = ssub.s32 1, %s8
  %s11 = scalar_select 0, %s10, %s8
  $region1: #{tpu_custom_call.1} parent=0
    #allocation5 [shape = 'u8[4096]{0}', space=vmem, size = 0x1000, scoped, tag = 'output window, operand 0, single buffered']
    #allocation6 [shape = 's32[1]{0}', space=sflag, size = 0x4, scoped, tag = 'scoped memory for tpu_custom_call.1']
    %12 = vsyncpa [#allocation6], 0
    // Predicated region
    $region2: #{tpu_custom_call.1} parent=1 // pred_check
      _
    $region3: #{tpu_custom_call.1} parent=1 // pred_check_branch
      %14 = sbr.rel (0) target = $region5
    $region4: #{tpu_custom_call.1} parent=1 // pred_region
      _
    $region5: #{tpu_custom_call.1} parent=1 // pred_fallthru
      _
    // Predicated region
    $region6: #{tpu_custom_call.1} parent=1 // pred_check
      _
    $region7: #{tpu_custom_call.1} parent=1 // pred_check_branch
      %16 = sbr.rel (0) target = $region9
    $region8: #{tpu_custom_call.1} parent=1 // pred_region
      _
    $region9: #{tpu_custom_call.1} parent=1 // pred_fallthru
      _
    // Predicated region
    $region10: #{tpu_custom_call.1} parent=1 // pred_check
      _
    $region11: #{tpu_custom_call.1} parent=1 // pred_check_branch
      %18 = sbr.rel (0) target = $region13
    $region12: #{tpu_custom_call.1} parent=1 // pred_region
      _
    $region13: #{tpu_custom_call.1} parent=1 // pred_fallthru
      _
    // Predicated region
    $region14: #{tpu_custom_call.1} parent=1 // pred_check
      _
    $region15: #{tpu_custom_call.1} parent=1 // pred_check_branch
      %20 = sbr.rel (0) target = $region17
    $region16: #{tpu_custom_call.1} parent=1 // pred_region
      _
    $region17: #{tpu_custom_call.1} parent=1 // pred_fallthru
      _
    // Predicated region
    $region18: #{tpu_custom_call.1} parent=1 // pred_check
      _
    $region19: #{tpu_custom_call.1} parent=1 // pred_check_branch
      %22 = sbr.rel (0) target = $region21
    $region20: #{tpu_custom_call.1} parent=1 // pred_region
      _
    $region21: #{tpu_custom_call.1} parent=1 // pred_fallthru
      _
    %p23 = scmp.eq.s32.totalorder 0, 0
    // Predicated region
    $region22: #{tpu_custom_call.1} parent=1 // pred_check
      %p24 = pneg %p23
    $region23: #{tpu_custom_call.1} parent=1 // pred_check_branch
      %26 = sbr.rel (%p24) target = $region25
    $region24: #{tpu_custom_call.1} parent=1 // pred_region
      %v27 = vld [vmem:[%s4] sm:$0xff]
      %v28 = vld [vmem:[%s4 + $0x8] sm:$0xff]
      %vm29 = vcmask 261120
      %30 = vst.msk [vmem:[#allocation2] sm:$0xff] %vm29, %v27
      %31 = vst.msk [vmem:[#allocation2 + $0x8] sm:$0xff] %vm29, %v28
      %vm32 = vcmask 7168
      %33 = vst.msk [vmem:[#allocation3] sm:$0xff] %vm32, 1.0
      %34 = vst.msk [vmem:[#allocation3 + $0x8] sm:$0xff] %vm32, 1.0
      %35 = vst.msk [vmem:[#allocation4] sm:$0xff] %vm29, 0.0
      %36 = vst.msk [vmem:[#allocation4 + $0x8] sm:$0xff] %vm29, 0.0
    $region25: #{tpu_custom_call.1} parent=1 // pred_fallthru
      _
    %v37 = vld [vmem:[%s2] sm:$0xff]
    %v38 = vld [vmem:[%s2 + $0x8] sm:$0xff]
    %v39 = vld [vmem:[%s2 + $0x10] sm:$0xff]
    %v40 = vld [vmem:[%s2 + $0x18] sm:$0xff]
    %v41 = vld [vmem:[%s2 + $0x20] sm:$0xff]
    %v42 = vld [vmem:[%s2 + $0x28] sm:$0xff]
    %v43 = vld [vmem:[%s2 + $0x30] sm:$0xff]
    %v44 = vld [vmem:[%s2 + $0x38] sm:$0xff]
    %v45 = vld [vmem:[%s3] sm:$0x1]
    %vm46 = vcmp.lt.f32.partialorder %v45, 0.0
    %v47 = vsel %vm46, 1, 0
    %v48 = vcvt.s32.f32 %v47
    %v49 = vld [vmem:[#allocation2] sm:$0xff]
    %v50 = vld [vmem:[#allocation2 + $0x8] sm:$0xff]
    %v51 = vld [vmem:[#allocation3] sm:$0xff]
    %v52 = vld [vmem:[#allocation3 + $0x8] sm:$0xff]
    %v53 = vld [vmem:[#allocation4] sm:$0xff]
    %v54 = vld [vmem:[#allocation4 + $0x8] sm:$0xff]
    %v55 = vld [vmem:[%s0] sm:$0xff]
    %v56 = vld [vmem:[%s0 + $0x8] sm:$0xff]
    %v57 = vld [vmem:[%s1] sm:$0xff]
    %v58 = vld [vmem:[%s1 + $0x8] sm:$0xff]
    %vm59 = vcmask 261120
    %v61 = vsel %vm59, %v55, 0
    %v64 = vsel %vm59, %v56, 0
    %v67 = vsel %vm59, %v49, 0
    %v70 = vsel %vm59, %v50, 0
    %72 = vmatprep.subr.mxu0 0.0
    %73 = vmatpush1.xpose.msra.mxu0 %v67
    %74 = vmatprep.subr.mxu0 0.0
    %75 = vmatpush1.xpose.msra.mxu0 %v70
    %76 = vmatprep.subr.mxu0 0.0
    %77 = vmatpush1.xpose.msra.mxu0 0.0
    %78 = vmatprep.subr.mxu0 0.0
    %79 = vmatpush1.xpose.msra.mxu0 0.0
    %80 = vmatprep.subr.mxu0 0.0
    %81 = vmatpush1.xpose.msra.mxu0 0.0
    %82 = vmatprep.subr.mxu0 0.0
    %83 = vmatpush1.xpose.msra.mxu0 0.0
    %84 = vmatprep.subr.mxu0 0.0
    %85 = vmatpush1.xpose.msra.mxu0 0.0
    %86 = vmatprep.subr.mxu0 0.0
    %87 = vmatpush1.xpose.msra.mxu0 0.0
    %88 = vmatprep.subr.mxu0 0.0
    %89 = vmatpush1.xpose.msra.mxu0 0.0
    %90 = vmatprep.subr.mxu0 0.0
    %91 = vmatpush1.xpose.msra.mxu0 0.0
    %92 = vmatprep.subr.mxu0 0.0
    %93 = vmatpush1.xpose.msra.mxu0 0.0
    %94 = vmatprep.subr.mxu0 0.0
    %95 = vmatpush1.xpose.msra.mxu0 0.0
    %96 = vmatprep.subr.mxu0 0.0
    %97 = vmatpush1.xpose.msra.mxu0 0.0
    %98 = vmatprep.subr.mxu0 0.0
    %99 = vmatpush1.xpose.msra.mxu0 0.0
    %100 = vmatprep.subr.mxu0 0.0
    %101 = vmatpush1.xpose.msra.mxu0 0.0
    %102 = vmatprep.subr.mxu0 0.0
    %103 = vmatpush1.xpose.msra.mxu0 0.0
    %104 = vmatprep.subr.mxu0 0.0
    %105 = vmatpush1.xpose.msra.mxu0 0.0
    %106 = vmatprep.subr.mxu0 0.0
    %107 = vmatpush1.xpose.msra.mxu0 0.0
    %108 = vmatprep.subr.mxu0 0.0
    %109 = vmatpush1.xpose.msra.mxu0 0.0
    %110 = vmatprep.subr.mxu0 0.0
    %111 = vmatpush1.xpose.msra.mxu0 0.0
    %112 = vmatprep.subr.mxu0 0.0
    %113 = vmatpush1.xpose.msra.mxu0 0.0
    %114 = vmatprep.subr.mxu0 0.0
    %115 = vmatpush1.xpose.msra.mxu0 0.0
    %116 = vmatprep.subr.mxu0 0.0
    %117 = vmatpush1.xpose.msra.mxu0 0.0
    %118 = vmatprep.subr.mxu0 0.0
    %119 = vmatpush1.xpose.msra.mxu0 0.0
    %120 = vmatprep.subr.mxu0 0.0
    %121 = vmatpush1.xpose.msra.mxu0 0.0
    %122 = vmatprep.subr.mxu0 0.0
    %123 = vmatpush1.xpose.msra.mxu0 0.0
    %124 = vmatprep.subr.mxu0 0.0
    %125 = vmatpush1.xpose.msra.mxu0 0.0
    %126 = vmatprep.subr.mxu0 0.0
    %127 = vmatpush1.xpose.msra.mxu0 0.0
    %128 = vmatprep.subr.mxu0 0.0
    %129 = vmatpush1.xpose.msra.mxu0 0.0
    %130 = vmatprep.subr.mxu0 0.0
    %131 = vmatpush1.xpose.msra.mxu0 0.0
    %132 = vmatprep.subr.mxu0 0.0
    %133 = vmatpush1.xpose.msra.mxu0 0.0
    %134 = vmatprep.subr.mxu0 0.0
    %135 = vmatpush1.xpose.msra.mxu0 0.0
    %136 = vmatprep.mubr.f32.mxu0 0.0
    %137 = vmatmul.mubr.f32.gmra.mrb[0].mxu0 %v61
    %v138 = vpop.f32.mrb[0].mxu0
    %v139 = vadd.f32 0.0, %v138
    %v140 = vpop.f32.mrb[0].mxu0
    %141 = vmatprep.mubr.f32.mxu0 0.0
    %142 = vmatmul.mubr.f32.gmra.mrb[0].mxu0 %v64
    %v143 = vpop.f32.mrb[0].mxu0
    %v144 = vadd.f32 0.0, %v143
    %v145 = vpop.f32.mrb[0].mxu0
    %146 = vdwg.mxu0
    %148 = vset.pattern.permute.xlu0 0
    %149 = vperm.xlu0 %148, %v57
    %v150 = vpop.permute.xlu0 %149
    %153 = vset.pattern.permute.xlu0 0
    %154 = vperm.xlu0 %153, %v58
    %v155 = vpop.permute.xlu0 %154
    %v157 = vmul.f32 %v150, %v139
    %v158 = vmul.f32 %v155, %v144
    %vm159 = vcmp.le.f32.partialorder %v157, 0.0
    %vm160 = vcmp.le.f32.partialorder %v158, 0.0
    %v161 = vsel %vm159, %v150, 0.0
    %v162 = vsel %vm160, %v155, 0.0
    %163 = vxpose.xlu0.b32.start [1/16] %v161, 128
    %164 = vxpose.xlu0.b32.cont [2/16] %v162, 128
    %165 = vxpose.xlu0.b32.cont [3/16] 0.0, 128
    %166 = vxpose.xlu0.b32.cont [4/16] 0.0, 128
    %167 = vxpose.xlu0.b32.cont [5/16] 0.0, 128
    %168 = vxpose.xlu0.b32.cont [6/16] 0.0, 128
    %169 = vxpose.xlu0.b32.cont [7/16] 0.0, 128
    %170 = vxpose.xlu0.b32.cont [8/16] 0.0, 128
    %171 = vxpose.xlu0.b32.cont [9/16] 0.0, 128
    %172 = vxpose.xlu0.b32.cont [10/16] 0.0, 128
    %173 = vxpose.xlu0.b32.cont [11/16] 0.0, 128
    %174 = vxpose.xlu0.b32.cont [12/16] 0.0, 128
    %175 = vxpose.xlu0.b32.cont [13/16] 0.0, 128
    %176 = vxpose.xlu0.b32.cont [14/16] 0.0, 128
    %177 = vxpose.xlu0.b32.cont [15/16] 0.0, 128
    %178 = vxpose.xlu0.b32.end [16/16] 0.0, 128
    %v179 = vpop.trf.xlu0
    %v180 = vpop.trf.xlu0
    %v181 = vpop.trf.xlu0
    %v182 = vpop.trf.xlu0
    %v183 = vpop.trf.xlu0
    %v184 = vpop.trf.xlu0
    %v185 = vpop.trf.xlu0
    %v186 = vpop.trf.xlu0
    %v187 = vpop.trf.xlu0
    %v188 = vpop.trf.xlu0
    %v189 = vpop.trf.xlu0
    %v190 = vpop.trf.xlu0
    %v191 = vpop.trf.xlu0
    %v192 = vpop.trf.xlu0
    %v193 = vpop.trf.xlu0
    %v194 = vpop.trf.xlu0
    %vm195 = vcmask 130048
    %v197 = vsel %vm195, %v179, 0
    %v200 = vsel %vm195, %v180, 0
    %202 = vmatprep.subr.mxu0 0.0
    %203 = vmatpush1.msra.mxu0 %v55
    %204 = vmatprep.subr.mxu0 0.0
    %205 = vmatpush1.msra.mxu0 %v56
    %206 = vmatprep.subr.mxu0 0.0
    %207 = vmatpush1.msra.mxu0 0.0
    %208 = vmatprep.subr.mxu0 0.0
    %209 = vmatpush1.msra.mxu0 0.0
    %210 = vmatprep.subr.mxu0 0.0
    %211 = vmatpush1.msra.mxu0 0.0
    %212 = vmatprep.subr.mxu0 0.0
    %213 = vmatpush1.msra.mxu0 0.0
    %214 = vmatprep.subr.mxu0 0.0
    %215 = vmatpush1.msra.mxu0 0.0
    %216 = vmatprep.subr.mxu0 0.0
    %217 = vmatpush1.msra.mxu0 0.0
    %218 = vmatprep.subr.mxu0 0.0
    %219 = vmatpush1.msra.mxu0 0.0
    %220 = vmatprep.subr.mxu0 0.0
    %221 = vmatpush1.msra.mxu0 0.0
    %222 = vmatprep.subr.mxu0 0.0
    %223 = vmatpush1.msra.mxu0 0.0
    %224 = vmatprep.subr.mxu0 0.0
    %225 = vmatpush1.msra.mxu0 0.0
    %226 = vmatprep.subr.mxu0 0.0
    %227 = vmatpush1.msra.mxu0 0.0
    %228 = vmatprep.subr.mxu0 0.0
    %229 = vmatpush1.msra.mxu0 0.0
    %230 = vmatprep.subr.mxu0 0.0
    %231 = vmatpush1.msra.mxu0 0.0
    %232 = vmatprep.subr.mxu0 0.0
    %233 = vmatpush1.msra.mxu0 0.0
    %234 = vmatprep.subr.mxu0 0.0
    %235 = vmatpush1.msra.mxu0 0.0
    %236 = vmatprep.subr.mxu0 0.0
    %237 = vmatpush1.msra.mxu0 0.0
    %238 = vmatprep.subr.mxu0 0.0
    %239 = vmatpush1.msra.mxu0 0.0
    %240 = vmatprep.subr.mxu0 0.0
    %241 = vmatpush1.msra.mxu0 0.0
    %242 = vmatprep.subr.mxu0 0.0
    %243 = vmatpush1.msra.mxu0 0.0
    %244 = vmatprep.subr.mxu0 0.0
    %245 = vmatpush1.msra.mxu0 0.0
    %246 = vmatprep.subr.mxu0 0.0
    %247 = vmatpush1.msra.mxu0 0.0
    %248 = vmatprep.subr.mxu0 0.0
    %249 = vmatpush1.msra.mxu0 0.0
    %250 = vmatprep.subr.mxu0 0.0
    %251 = vmatpush1.msra.mxu0 0.0
    %252 = vmatprep.subr.mxu0 0.0
    %253 = vmatpush1.msra.mxu0 0.0
    %254 = vmatprep.subr.mxu0 0.0
    %255 = vmatpush1.msra.mxu0 0.0
    %256 = vmatprep.subr.mxu0 0.0
    %257 = vmatpush1.msra.mxu0 0.0
    %258 = vmatprep.subr.mxu0 0.0
    %259 = vmatpush1.msra.mxu0 0.0
    %260 = vmatprep.subr.mxu0 0.0
    %261 = vmatpush1.msra.mxu0 0.0
    %262 = vmatprep.subr.mxu0 0.0
    %263 = vmatpush1.msra.mxu0 0.0
    %264 = vmatprep.subr.mxu0 0.0
    %265 = vmatpush1.msra.mxu0 0.0
    %266 = vmatprep.mubr.f32.mxu0 0.0
    %267 = vmatmul.mubr.f32.gmra.mrb[0].mxu0 %v197
    %v268 = vpop.f32.mrb[0].mxu0
    %v269 = vadd.f32 0.0, %v268
    %v270 = vpop.f32.mrb[0].mxu0
    %271 = vmatprep.mubr.f32.mxu0 0.0
    %272 = vmatmul.mubr.f32.gmra.mrb[0].mxu0 %v200
    %v273 = vpop.f32.mrb[0].mxu0
    %v274 = vadd.f32 0.0, %v273
    %v275 = vpop.f32.mrb[0].mxu0
    %276 = vdwg.mxu0
    %v277 = vmul.f32 %v269, %v49
    %v278 = vmul.f32 %v274, %v50
    %v279 = vsel %vm59, %v277, 0.0
    %280 = vadd.xlane.f32.xlu0 %v279
    %v281 = vpop.xlane.xlu0 %280
    %v282 = vsel %vm59, %v278, 0.0
    %283 = vadd.xlane.f32.xlu0 %v282
    %v284 = vpop.xlane.xlu0 %283
    %v285 = vmul.f32 %v281, %v49
    %v286 = vmul.f32 %v284, %v50
    %v287 = vsub.f32 %v269, %v285
    %v288 = vsub.f32 %v274, %v286
    %v289 = vmul.f32 %v287, 0.003125
    %v290 = vmul.f32 %v288, 0.003125
    %v291 = vadd.f32 %v49, %v289
    %v292 = vadd.f32 %v50, %v290
    %v293 = vmul.f32 %v291, %v291
    %v294 = vmul.f32 %v292, %v292
    %v295 = vsel %vm59, %v293, 0.0
    %296 = vadd.xlane.f32.xlu0 %v295
    %v297 = vpop.xlane.xlu0 %296
    %v298 = vsel %vm59, %v294, 0.0
    %299 = vadd.xlane.f32.xlu0 %v298
    %v300 = vpop.xlane.xlu0 %299
    %v301 = vmax.f32 %v297, 1e-12
    %v302 = vmax.f32 %v300, 1e-12
    %v303 = vrsqrt.pop %v301
    %v304 = vrsqrt.pop %v302
    %v305 = vmul.f32 %v291, %v303
    %v306 = vmul.f32 %v292, %v304
    %v308 = vsel %vm59, %v305, 0
    %v311 = vsel %vm59, %v306, 0
    %v314 = vsel %vm59, %v37, 0
    %v317 = vsel %vm59, %v38, 0
    %v320 = vsel %vm59, %v39, 0
    %v323 = vsel %vm59, %v40, 0
    %v326 = vsel %vm59, %v41, 0
    %v329 = vsel %vm59, %v42, 0
    %v332 = vsel %vm59, %v43, 0
    %v335 = vsel %vm59, %v44, 0
    %337 = vmatprep.subr.mxu0 0.0
    %338 = vmatpush1.xpose.msra.mxu0 %v314
    %339 = vmatprep.subr.mxu0 0.0
    %340 = vmatpush1.xpose.msra.mxu0 %v317
    %341 = vmatprep.subr.mxu0 0.0
    %342 = vmatpush1.xpose.msra.mxu0 %v320
    %343 = vmatprep.subr.mxu0 0.0
    %344 = vmatpush1.xpose.msra.mxu0 %v323
    %345 = vmatprep.subr.mxu0 0.0
    %346 = vmatpush1.xpose.msra.mxu0 %v326
    %347 = vmatprep.subr.mxu0 0.0
    %348 = vmatpush1.xpose.msra.mxu0 %v329
    %349 = vmatprep.subr.mxu0 0.0
    %350 = vmatpush1.xpose.msra.mxu0 %v332
    %351 = vmatprep.subr.mxu0 0.0
    %352 = vmatpush1.xpose.msra.mxu0 %v335
    %353 = vmatprep.subr.mxu0 0.0
    %354 = vmatpush1.xpose.msra.mxu0 0.0
    %355 = vmatprep.subr.mxu0 0.0
    %356 = vmatpush1.xpose.msra.mxu0 0.0
    %357 = vmatprep.subr.mxu0 0.0
    %358 = vmatpush1.xpose.msra.mxu0 0.0
    %359 = vmatprep.subr.mxu0 0.0
    %360 = vmatpush1.xpose.msra.mxu0 0.0
    %361 = vmatprep.subr.mxu0 0.0
    %362 = vmatpush1.xpose.msra.mxu0 0.0
    %363 = vmatprep.subr.mxu0 0.0
    %364 = vmatpush1.xpose.msra.mxu0 0.0
    %365 = vmatprep.subr.mxu0 0.0
    %366 = vmatpush1.xpose.msra.mxu0 0.0
    %367 = vmatprep.subr.mxu0 0.0
    %368 = vmatpush1.xpose.msra.mxu0 0.0
    %369 = vmatprep.subr.mxu0 0.0
    %370 = vmatpush1.xpose.msra.mxu0 0.0
    %371 = vmatprep.subr.mxu0 0.0
    %372 = vmatpush1.xpose.msra.mxu0 0.0
    %373 = vmatprep.subr.mxu0 0.0
    %374 = vmatpush1.xpose.msra.mxu0 0.0
    %375 = vmatprep.subr.mxu0 0.0
    %376 = vmatpush1.xpose.msra.mxu0 0.0
    %377 = vmatprep.subr.mxu0 0.0
    %378 = vmatpush1.xpose.msra.mxu0 0.0
    %379 = vmatprep.subr.mxu0 0.0
    %380 = vmatpush1.xpose.msra.mxu0 0.0
    %381 = vmatprep.subr.mxu0 0.0
    %382 = vmatpush1.xpose.msra.mxu0 0.0
    %383 = vmatprep.subr.mxu0 0.0
    %384 = vmatpush1.xpose.msra.mxu0 0.0
    %385 = vmatprep.subr.mxu0 0.0
    %386 = vmatpush1.xpose.msra.mxu0 0.0
    %387 = vmatprep.subr.mxu0 0.0
    %388 = vmatpush1.xpose.msra.mxu0 0.0
    %389 = vmatprep.subr.mxu0 0.0
    %390 = vmatpush1.xpose.msra.mxu0 0.0
    %391 = vmatprep.subr.mxu0 0.0
    %392 = vmatpush1.xpose.msra.mxu0 0.0
    %393 = vmatprep.subr.mxu0 0.0
    %394 = vmatpush1.xpose.msra.mxu0 0.0
    %395 = vmatprep.subr.mxu0 0.0
    %396 = vmatpush1.xpose.msra.mxu0 0.0
    %397 = vmatprep.subr.mxu0 0.0
    %398 = vmatpush1.xpose.msra.mxu0 0.0
    %399 = vmatprep.subr.mxu0 0.0
    %400 = vmatpush1.xpose.msra.mxu0 0.0
    %401 = vmatprep.mubr.f32.mxu0 0.0
    %402 = vmatmul.mubr.f32.gmra.mrb[0].mxu0 %v308
    %v403 = vpop.f32.mrb[0].mxu0
    %v404 = vadd.f32 0.0, %v403
    %v405 = vpop.f32.mrb[0].mxu0
    %406 = vmatprep.mubr.f32.mxu0 0.0
    %407 = vmatmul.mubr.f32.gmra.mrb[0].mxu0 %v311
    %v408 = vpop.f32.mrb[0].mxu0
    %v409 = vadd.f32 0.0, %v408
    %v410 = vpop.f32.mrb[0].mxu0
    %411 = vdwg.mxu0
    %vm412 = vcmp.gt.f32.partialorder %v404, 0.0
    %vm413 = vcmp.gt.f32.partialorder %v409, 0.0
    %v415 = vlaneseq
    %v416 = vshrl.u32 %v415, 7
    %v417 = vsub.s32 0, %v416
    %v418 = vrot.slane %v48, %v417
    %v420 = vsel %vm412, %v418, 0.0
    %v421 = vsel %vm413, %v418, 0.0
    %vm422 = vcmask 523264
    %v423 = vsel %vm422, %v420, 0.0
    %424 = vadd.xlane.f32.xlu0 %v423
    %v425 = vpop.xlane.xlu0 %424
    %v426 = vsel %vm422, %v421, 0.0
    %427 = vadd.xlane.f32.xlu0 %v426
    %v428 = vpop.xlane.xlu0 %427
    %v429 = vsel %vm412, 1, 0
    %v430 = vsel %vm413, 1, 0
    %v431 = vcvt.s32.f32 %v429
    %v432 = vcvt.s32.f32 %v430
    %v433 = vsel %vm422, %v431, 0.0
    %434 = vadd.xlane.f32.xlu0 %v433
    %v435 = vpop.xlane.xlu0 %434
    %v436 = vsel %vm422, %v432, 0.0
    %437 = vadd.xlane.f32.xlu0 %v436
    %v438 = vpop.xlane.xlu0 %437
    %v439 = vmax.f32 %v435, 1.0
    %v440 = vmax.f32 %v438, 1.0
    %v441 = vrcp.pop %v439
    %v442 = vrcp.pop %v440
    %vm443 = vcmp.gt.f32.partialorder %v435, 0.0
    %vm444 = vcmp.gt.f32.partialorder %v438, 0.0
    %v445 = vmul.f32 %v425, %v441
    %v446 = vmul.f32 %v428, %v442
    %v447 = vsel %vm443, %v445, 1.0
    %v448 = vsel %vm444, %v446, 1.0
    %vm449 = vcmp.lt.f32.partialorder %v447, %v51
    %vm450 = vcmp.lt.f32.partialorder %v448, %v52
    %v451 = vsel %vm449, %v447, %v51
    %v452 = vsel %vm450, %v448, %v52
    %v453 = vsel %vm449, 1, 0
    %v454 = vsel %vm450, 1, 0
    %455 = vset.pattern.permute.xlu0 0
    %456 = vperm.xlu0 %455, %v453
    %v457 = vpop.permute.xlu0 %456
    %458 = vset.pattern.permute.xlu0 0
    %459 = vperm.xlu0 %458, %v454
    %v460 = vpop.permute.xlu0 %459
    %vm461 = vcmp.eq.s32.totalorder %v457, 1
    %vm462 = vcmp.eq.s32.totalorder %v460, 1
    %v463 = vsel %vm461, %v305, %v53
    %v464 = vsel %vm462, %v306, %v54
    %s465 = scalar_lea.vmem %s0, 16
    %v466 = vld [vmem:[%s465] sm:$0xff]
    %v467 = vld [vmem:[%s465 + $0x8] sm:$0xff]
    %s468 = scalar_lea.vmem %s1, 16
    %v469 = vld [vmem:[%s468] sm:$0xff]
    %v470 = vld [vmem:[%s468 + $0x8] sm:$0xff]
    %v472 = vsel %vm59, %v466, 0
    %v475 = vsel %vm59, %v467, 0
    %477 = vmatprep.subr.mxu0 0.0
    %478 = vmatpush1.xpose.msra.mxu0 %v308
    %479 = vmatprep.subr.mxu0 0.0
    %480 = vmatpush1.xpose.msra.mxu0 %v311
    %481 = vmatprep.subr.mxu0 0.0
    %482 = vmatpush1.xpose.msra.mxu0 0.0
    %483 = vmatprep.subr.mxu0 0.0
    %484 = vmatpush1.xpose.msra.mxu0 0.0
    %485 = vmatprep.subr.mxu0 0.0
    %486 = vmatpush1.xpose.msra.mxu0 0.0
    %487 = vmatprep.subr.mxu0 0.0
    %488 = vmatpush1.xpose.msra.mxu0 0.0
    %489 = vmatprep.subr.mxu0 0.0
    %490 = vmatpush1.xpose.msra.mxu0 0.0
    %491 = vmatprep.subr.mxu0 0.0
    %492 = vmatpush1.xpose.msra.mxu0 0.0
    %493 = vmatprep.subr.mxu0 0.0
    %494 = vmatpush1.xpose.msra.mxu0 0.0
    %495 = vmatprep.subr.mxu0 0.0
    %496 = vmatpush1.xpose.msra.mxu0 0.0
    %497 = vmatprep.subr.mxu0 0.0
    %498 = vmatpush1.xpose.msra.mxu0 0.0
    %499 = vmatprep.subr.mxu0 0.0
    %500 = vmatpush1.xpose.msra.mxu0 0.0
    %501 = vmatprep.subr.mxu0 0.0
    %502 = vmatpush1.xpose.msra.mxu0 0.0
    %503 = vmatprep.subr.mxu0 0.0
    %504 = vmatpush1.xpose.msra.mxu0 0.0
    %505 = vmatprep.subr.mxu0 0.0
    %506 = vmatpush1.xpose.msra.mxu0 0.0
    %507 = vmatprep.subr.mxu0 0.0
    %508 = vmatpush1.xpose.msra.mxu0 0.0
    %509 = vmatprep.subr.mxu0 0.0
    %510 = vmatpush1.xpose.msra.mxu0 0.0
    %511 = vmatprep.subr.mxu0 0.0
    %512 = vmatpush1.xpose.msra.mxu0 0.0
    %513 = vmatprep.subr.mxu0 0.0
    %514 = vmatpush1.xpose.msra.mxu0 0.0
    %515 = vmatprep.subr.mxu0 0.0
    %516 = vmatpush1.xpose.msra.mxu0 0.0
    %517 = vmatprep.subr.mxu0 0.0
    %518 = vmatpush1.xpose.msra.mxu0 0.0
    %519 = vmatprep.subr.mxu0 0.0
    %520 = vmatpush1.xpose.msra.mxu0 0.0
    %521 = vmatprep.subr.mxu0 0.0
    %522 = vmatpush1.xpose.msra.mxu0 0.0
    %523 = vmatprep.subr.mxu0 0.0
    %524 = vmatpush1.xpose.msra.mxu0 0.0
    %525 = vmatprep.subr.mxu0 0.0
    %526 = vmatpush1.xpose.msra.mxu0 0.0
    %527 = vmatprep.subr.mxu0 0.0
    %528 = vmatpush1.xpose.msra.mxu0 0.0
    %529 = vmatprep.subr.mxu0 0.0
    %530 = vmatpush1.xpose.msra.mxu0 0.0
    %531 = vmatprep.subr.mxu0 0.0
    %532 = vmatpush1.xpose.msra.mxu0 0.0
    %533 = vmatprep.subr.mxu0 0.0
    %534 = vmatpush1.xpose.msra.mxu0 0.0
    %535 = vmatprep.subr.mxu0 0.0
    %536 = vmatpush1.xpose.msra.mxu0 0.0
    %537 = vmatprep.subr.mxu0 0.0
    %538 = vmatpush1.xpose.msra.mxu0 0.0
    %539 = vmatprep.subr.mxu0 0.0
    %540 = vmatpush1.xpose.msra.mxu0 0.0
    %541 = vmatprep.mubr.f32.mxu0 0.0
    %542 = vmatmul.mubr.f32.gmra.mrb[0].mxu0 %v472
    %v543 = vpop.f32.mrb[0].mxu0
    %v544 = vadd.f32 0.0, %v543
    %v545 = vpop.f32.mrb[0].mxu0
    %546 = vmatprep.mubr.f32.mxu0 0.0
    %547 = vmatmul.mubr.f32.gmra.mrb[0].mxu0 %v475
    %v548 = vpop.f32.mrb[0].mxu0
    %v549 = vadd.f32 0.0, %v548
    %v550 = vpop.f32.mrb[0].mxu0
    %551 = vdwg.mxu0
    %553 = vset.pattern.permute.xlu0 0
    %554 = vperm.xlu0 %553, %v469
    %v555 = vpop.permute.xlu0 %554
    %558 = vset.pattern.permute.xlu0 0
    %559 = vperm.xlu0 %558, %v470
    %v560 = vpop.permute.xlu0 %559
    %v562 = vmul.f32 %v555, %v544
    %v563 = vmul.f32 %v560, %v549
    %vm564 = vcmp.le.f32.partialorder %v562, 0.0
    %vm565 = vcmp.le.f32.partialorder %v563, 0.0
    %v566 = vsel %vm564, %v555, 0.0
    %v567 = vsel %vm565, %v560, 0.0
    %568 = vxpose.xlu0.b32.start [1/16] %v566, 128
    %569 = vxpose.xlu0.b32.cont [2/16] %v567, 128
    %570 = vxpose.xlu0.b32.cont [3/16] 0.0, 128
    %571 = vxpose.xlu0.b32.cont [4/16] 0.0, 128
    %572 = vxpose.xlu0.b32.cont [5/16] 0.0, 128
    %573 = vxpose.xlu0.b32.cont [6/16] 0.0, 128
    %574 = vxpose.xlu0.b32.cont [7/16] 0.0, 128
    %575 = vxpose.xlu0.b32.cont [8/16] 0.0, 128
    %576 = vxpose.xlu0.b32.cont [9/16] 0.0, 128
    %577 = vxpose.xlu0.b32.cont [10/16] 0.0, 128
    %578 = vxpose.xlu0.b32.cont [11/16] 0.0, 128
    %579 = vxpose.xlu0.b32.cont [12/16] 0.0, 128
    %580 = vxpose.xlu0.b32.cont [13/16] 0.0, 128
    %581 = vxpose.xlu0.b32.cont [14/16] 0.0, 128
    %582 = vxpose.xlu0.b32.cont [15/16] 0.0, 128
    %583 = vxpose.xlu0.b32.end [16/16] 0.0, 128
    %v584 = vpop.trf.xlu0
    %v585 = vpop.trf.xlu0
    %v586 = vpop.trf.xlu0
    %v587 = vpop.trf.xlu0
    %v588 = vpop.trf.xlu0
    %v589 = vpop.trf.xlu0
    %v590 = vpop.trf.xlu0
    %v591 = vpop.trf.xlu0
    %v592 = vpop.trf.xlu0
    %v593 = vpop.trf.xlu0
    %v594 = vpop.trf.xlu0
    %v595 = vpop.trf.xlu0
    %v596 = vpop.trf.xlu0
    %v597 = vpop.trf.xlu0
    %v598 = vpop.trf.xlu0
    %v599 = vpop.trf.xlu0
    %v601 = vsel %vm195, %v584, 0
    %v604 = vsel %vm195, %v585, 0
    %606 = vmatprep.subr.mxu0 0.0
    %607 = vmatpush1.msra.mxu0 %v466
    %608 = vmatprep.subr.mxu0 0.0
    %609 = vmatpush1.msra.mxu0 %v467
    %610 = vmatprep.subr.mxu0 0.0
    %611 = vmatpush1.msra.mxu0 0.0
    %612 = vmatprep.subr.mxu0 0.0
    %613 = vmatpush1.msra.mxu0 0.0
    %614 = vmatprep.subr.mxu0 0.0
    %615 = vmatpush1.msra.mxu0 0.0
    %616 = vmatprep.subr.mxu0 0.0
    %617 = vmatpush1.msra.mxu0 0.0
    %618 = vmatprep.subr.mxu0 0.0
    %619 = vmatpush1.msra.mxu0 0.0
    %620 = vmatprep.subr.mxu0 0.0
    %621 = vmatpush1.msra.mxu0 0.0
    %622 = vmatprep.subr.mxu0 0.0
    %623 = vmatpush1.msra.mxu0 0.0
    %624 = vmatprep.subr.mxu0 0.0
    %625 = vmatpush1.msra.mxu0 0.0
    %626 = vmatprep.subr.mxu0 0.0
    %627 = vmatpush1.msra.mxu0 0.0
    %628 = vmatprep.subr.mxu0 0.0
    %629 = vmatpush1.msra.mxu0 0.0
    %630 = vmatprep.subr.mxu0 0.0
    %631 = vmatpush1.msra.mxu0 0.0
    %632 = vmatprep.subr.mxu0 0.0
    %633 = vmatpush1.msra.mxu0 0.0
    %634 = vmatprep.subr.mxu0 0.0
    %635 = vmatpush1.msra.mxu0 0.0
    %636 = vmatprep.subr.mxu0 0.0
    %637 = vmatpush1.msra.mxu0 0.0
    %638 = vmatprep.subr.mxu0 0.0
    %639 = vmatpush1.msra.mxu0 0.0
    %640 = vmatprep.subr.mxu0 0.0
    %641 = vmatpush1.msra.mxu0 0.0
    %642 = vmatprep.subr.mxu0 0.0
    %643 = vmatpush1.msra.mxu0 0.0
    %644 = vmatprep.subr.mxu0 0.0
    %645 = vmatpush1.msra.mxu0 0.0
    %646 = vmatprep.subr.mxu0 0.0
    %647 = vmatpush1.msra.mxu0 0.0
    %648 = vmatprep.subr.mxu0 0.0
    %649 = vmatpush1.msra.mxu0 0.0
    %650 = vmatprep.subr.mxu0 0.0
    %651 = vmatpush1.msra.mxu0 0.0
    %652 = vmatprep.subr.mxu0 0.0
    %653 = vmatpush1.msra.mxu0 0.0
    %654 = vmatprep.subr.mxu0 0.0
    %655 = vmatpush1.msra.mxu0 0.0
    %656 = vmatprep.subr.mxu0 0.0
    %657 = vmatpush1.msra.mxu0 0.0
    %658 = vmatprep.subr.mxu0 0.0
    %659 = vmatpush1.msra.mxu0 0.0
    %660 = vmatprep.subr.mxu0 0.0
    %661 = vmatpush1.msra.mxu0 0.0
    %662 = vmatprep.subr.mxu0 0.0
    %663 = vmatpush1.msra.mxu0 0.0
    %664 = vmatprep.subr.mxu0 0.0
    %665 = vmatpush1.msra.mxu0 0.0
    %666 = vmatprep.subr.mxu0 0.0
    %667 = vmatpush1.msra.mxu0 0.0
    %668 = vmatprep.subr.mxu0 0.0
    %669 = vmatpush1.msra.mxu0 0.0
    %670 = vmatprep.mubr.f32.mxu0 0.0
    %671 = vmatmul.mubr.f32.gmra.mrb[0].mxu0 %v601
    %v672 = vpop.f32.mrb[0].mxu0
    %v673 = vadd.f32 0.0, %v672
    %v674 = vpop.f32.mrb[0].mxu0
    %675 = vmatprep.mubr.f32.mxu0 0.0
    %676 = vmatmul.mubr.f32.gmra.mrb[0].mxu0 %v604
    %v677 = vpop.f32.mrb[0].mxu0
    %v678 = vadd.f32 0.0, %v677
    %v679 = vpop.f32.mrb[0].mxu0
    %680 = vdwg.mxu0
    %v681 = vmul.f32 %v673, %v305
    %v682 = vmul.f32 %v678, %v306
    %v683 = vsel %vm59, %v681, 0.0
    %684 = vadd.xlane.f32.xlu0 %v683
    %v685 = vpop.xlane.xlu0 %684
    %v686 = vsel %vm59, %v682, 0.0
    %687 = vadd.xlane.f32.xlu0 %v686
    %v688 = vpop.xlane.xlu0 %687
    %v689 = vmul.f32 %v685, %v305
    %v690 = vmul.f32 %v688, %v306
    %v691 = vsub.f32 %v673, %v689
    %v692 = vsub.f32 %v678, %v690
    %v693 = vmul.f32 %v691, 0.003125
    %v694 = vmul.f32 %v692, 0.003125
    %v695 = vadd.f32 %v305, %v693
    %v696 = vadd.f32 %v306, %v694
    %v697 = vmul.f32 %v695, %v695
    %v698 = vmul.f32 %v696, %v696
    %v699 = vsel %vm59, %v697, 0.0
    %700 = vadd.xlane.f32.xlu0 %v699
    %v701 = vpop.xlane.xlu0 %700
    %v702 = vsel %vm59, %v698, 0.0
    %703 = vadd.xlane.f32.xlu0 %v702
    %v704 = vpop.xlane.xlu0 %703
    %v705 = vmax.f32 %v701, 1e-12
    %v706 = vmax.f32 %v704, 1e-12
    %v707 = vrsqrt.pop %v705
    %v708 = vrsqrt.pop %v706
    %v709 = vmul.f32 %v695, %v707
    %v710 = vmul.f32 %v696, %v708
    %v712 = vsel %vm59, %v709, 0
    %v715 = vsel %vm59, %v710, 0
    %717 = vmatprep.subr.mxu0 0.0
    %718 = vmatpush1.xpose.msra.mxu0 %v314
    %719 = vmatprep.subr.mxu0 0.0
    %720 = vmatpush1.xpose.msra.mxu0 %v317
    %721 = vmatprep.subr.mxu0 0.0
    %722 = vmatpush1.xpose.msra.mxu0 %v320
    %723 = vmatprep.subr.mxu0 0.0
    %724 = vmatpush1.xpose.msra.mxu0 %v323
    %725 = vmatprep.subr.mxu0 0.0
    %726 = vmatpush1.xpose.msra.mxu0 %v326
    %727 = vmatprep.subr.mxu0 0.0
    %728 = vmatpush1.xpose.msra.mxu0 %v329
    %729 = vmatprep.subr.mxu0 0.0
    %730 = vmatpush1.xpose.msra.mxu0 %v332
    %731 = vmatprep.subr.mxu0 0.0
    %732 = vmatpush1.xpose.msra.mxu0 %v335
    %733 = vmatprep.subr.mxu0 0.0
    %734 = vmatpush1.xpose.msra.mxu0 0.0
    %735 = vmatprep.subr.mxu0 0.0
    %736 = vmatpush1.xpose.msra.mxu0 0.0
    %737 = vmatprep.subr.mxu0 0.0
    %738 = vmatpush1.xpose.msra.mxu0 0.0
    %739 = vmatprep.subr.mxu0 0.0
    %740 = vmatpush1.xpose.msra.mxu0 0.0
    %741 = vmatprep.subr.mxu0 0.0
    %742 = vmatpush1.xpose.msra.mxu0 0.0
    %743 = vmatprep.subr.mxu0 0.0
    %744 = vmatpush1.xpose.msra.mxu0 0.0
    %745 = vmatprep.subr.mxu0 0.0
    %746 = vmatpush1.xpose.msra.mxu0 0.0
    %747 = vmatprep.subr.mxu0 0.0
    %748 = vmatpush1.xpose.msra.mxu0 0.0
    %749 = vmatprep.subr.mxu0 0.0
    %750 = vmatpush1.xpose.msra.mxu0 0.0
    %751 = vmatprep.subr.mxu0 0.0
    %752 = vmatpush1.xpose.msra.mxu0 0.0
    %753 = vmatprep.subr.mxu0 0.0
    %754 = vmatpush1.xpose.msra.mxu0 0.0
    %755 = vmatprep.subr.mxu0 0.0
    %756 = vmatpush1.xpose.msra.mxu0 0.0
    %757 = vmatprep.subr.mxu0 0.0
    %758 = vmatpush1.xpose.msra.mxu0 0.0
    %759 = vmatprep.subr.mxu0 0.0
    %760 = vmatpush1.xpose.msra.mxu0 0.0
    %761 = vmatprep.subr.mxu0 0.0
    %762 = vmatpush1.xpose.msra.mxu0 0.0
    %763 = vmatprep.subr.mxu0 0.0
    %764 = vmatpush1.xpose.msra.mxu0 0.0
    %765 = vmatprep.subr.mxu0 0.0
    %766 = vmatpush1.xpose.msra.mxu0 0.0
    %767 = vmatprep.subr.mxu0 0.0
    %768 = vmatpush1.xpose.msra.mxu0 0.0
    %769 = vmatprep.subr.mxu0 0.0
    %770 = vmatpush1.xpose.msra.mxu0 0.0
    %771 = vmatprep.subr.mxu0 0.0
    %772 = vmatpush1.xpose.msra.mxu0 0.0
    %773 = vmatprep.subr.mxu0 0.0
    %774 = vmatpush1.xpose.msra.mxu0 0.0
    %775 = vmatprep.subr.mxu0 0.0
    %776 = vmatpush1.xpose.msra.mxu0 0.0
    %777 = vmatprep.subr.mxu0 0.0
    %778 = vmatpush1.xpose.msra.mxu0 0.0
    %779 = vmatprep.subr.mxu0 0.0
    %780 = vmatpush1.xpose.msra.mxu0 0.0
    %781 = vmatprep.mubr.f32.mxu0 0.0
    %782 = vmatmul.mubr.f32.gmra.mrb[0].mxu0 %v712
    %v783 = vpop.f32.mrb[0].mxu0
    %v784 = vadd.f32 0.0, %v783
    %v785 = vpop.f32.mrb[0].mxu0
    %786 = vmatprep.mubr.f32.mxu0 0.0
    %787 = vmatmul.mubr.f32.gmra.mrb[0].mxu0 %v715
    %v788 = vpop.f32.mrb[0].mxu0
    %v789 = vadd.f32 0.0, %v788
    %v790 = vpop.f32.mrb[0].mxu0
    %791 = vdwg.mxu0
    %vm792 = vcmp.gt.f32.partialorder %v784, 0.0
    %vm793 = vcmp.gt.f32.partialorder %v789, 0.0
    %v794 = vsel %vm792, %v418, 0.0
    %v795 = vsel %vm793, %v418, 0.0
    %v796 = vsel %vm422, %v794, 0.0
    %797 = vadd.xlane.f32.xlu0 %v796
    %v798 = vpop.xlane.xlu0 %797
    %v799 = vsel %vm422, %v795, 0.0
    %800 = vadd.xlane.f32.xlu0 %v799
    %v801 = vpop.xlane.xlu0 %800
    %v802 = vsel %vm792, 1, 0
    %v803 = vsel %vm793, 1, 0
    %v804 = vcvt.s32.f32 %v802
    %v805 = vcvt.s32.f32 %v803
    %v806 = vsel %vm422, %v804, 0.0
    %807 = vadd.xlane.f32.xlu0 %v806
    %v808 = vpop.xlane.xlu0 %807
    %v809 = vsel %vm422, %v805, 0.0
    %810 = vadd.xlane.f32.xlu0 %v809
    %v811 = vpop.xlane.xlu0 %810
    %v812 = vmax.f32 %v808, 1.0
    %v813 = vmax.f32 %v811, 1.0
    %v814 = vrcp.pop %v812
    %v815 = vrcp.pop %v813
    %vm816 = vcmp.gt.f32.partialorder %v808, 0.0
    %vm817 = vcmp.gt.f32.partialorder %v811, 0.0
    %v818 = vmul.f32 %v798, %v814
    %v819 = vmul.f32 %v801, %v815
    %v820 = vsel %vm816, %v818, 1.0
    %v821 = vsel %vm817, %v819, 1.0
    %vm822 = vcmp.lt.f32.partialorder %v820, %v451
    %vm823 = vcmp.lt.f32.partialorder %v821, %v452
    %v824 = vsel %vm822, %v820, %v451
    %v825 = vsel %vm823, %v821, %v452
    %v826 = vsel %vm822, 1, 0
    %v827 = vsel %vm823, 1, 0
    %828 = vset.pattern.permute.xlu0 0
    %829 = vperm.xlu0 %828, %v826
    %v830 = vpop.permute.xlu0 %829
    %831 = vset.pattern.permute.xlu0 0
    %832 = vperm.xlu0 %831, %v827
    %v833 = vpop.permute.xlu0 %832
    %vm834 = vcmp.eq.s32.totalorder %v830, 1
    %vm835 = vcmp.eq.s32.totalorder %v833, 1
    %v836 = vsel %vm834, %v709, %v463
    %v837 = vsel %vm835, %v710, %v464
    %s838 = scalar_lea.vmem %s0, 32
    %v839 = vld [vmem:[%s838] sm:$0xff]
    %v840 = vld [vmem:[%s838 + $0x8] sm:$0xff]
    %s841 = scalar_lea.vmem %s1, 32
    %v842 = vld [vmem:[%s841] sm:$0xff]
    %v843 = vld [vmem:[%s841 + $0x8] sm:$0xff]
    %v845 = vsel %vm59, %v839, 0
    %v848 = vsel %vm59, %v840, 0
    %850 = vmatprep.subr.mxu0 0.0
    %851 = vmatpush1.xpose.msra.mxu0 %v712
    %852 = vmatprep.subr.mxu0 0.0
    %853 = vmatpush1.xpose.msra.mxu0 %v715
    %854 = vmatprep.subr.mxu0 0.0
    %855 = vmatpush1.xpose.msra.mxu0 0.0
    %856 = vmatprep.subr.mxu0 0.0
    %857 = vmatpush1.xpose.msra.mxu0 0.0
    %858 = vmatprep.subr.mxu0 0.0
    %859 = vmatpush1.xpose.msra.mxu0 0.0
    %860 = vmatprep.subr.mxu0 0.0
    %861 = vmatpush1.xpose.msra.mxu0 0.0
    %862 = vmatprep.subr.mxu0 0.0
    %863 = vmatpush1.xpose.msra.mxu0 0.0
    %864 = vmatprep.subr.mxu0 0.0
    %865 = vmatpush1.xpose.msra.mxu0 0.0
    %866 = vmatprep.subr.mxu0 0.0
    %867 = vmatpush1.xpose.msra.mxu0 0.0
    %868 = vmatprep.subr.mxu0 0.0
    %869 = vmatpush1.xpose.msra.mxu0 0.0
    %870 = vmatprep.subr.mxu0 0.0
    %871 = vmatpush1.xpose.msra.mxu0 0.0
    %872 = vmatprep.subr.mxu0 0.0
    %873 = vmatpush1.xpose.msra.mxu0 0.0
    %874 = vmatprep.subr.mxu0 0.0
    %875 = vmatpush1.xpose.msra.mxu0 0.0
    %876 = vmatprep.subr.mxu0 0.0
    %877 = vmatpush1.xpose.msra.mxu0 0.0
    %878 = vmatprep.subr.mxu0 0.0
    %879 = vmatpush1.xpose.msra.mxu0 0.0
    %880 = vmatprep.subr.mxu0 0.0
    %881 = vmatpush1.xpose.msra.mxu0 0.0
    %882 = vmatprep.subr.mxu0 0.0
    %883 = vmatpush1.xpose.msra.mxu0 0.0
    %884 = vmatprep.subr.mxu0 0.0
    %885 = vmatpush1.xpose.msra.mxu0 0.0
    %886 = vmatprep.subr.mxu0 0.0
    %887 = vmatpush1.xpose.msra.mxu0 0.0
    %888 = vmatprep.subr.mxu0 0.0
    %889 = vmatpush1.xpose.msra.mxu0 0.0
    %890 = vmatprep.subr.mxu0 0.0
    %891 = vmatpush1.xpose.msra.mxu0 0.0
    %892 = vmatprep.subr.mxu0 0.0
    %893 = vmatpush1.xpose.msra.mxu0 0.0
    %894 = vmatprep.subr.mxu0 0.0
    %895 = vmatpush1.xpose.msra.mxu0 0.0
    %896 = vmatprep.subr.mxu0 0.0
    %897 = vmatpush1.xpose.msra.mxu0 0.0
    %898 = vmatprep.subr.mxu0 0.0
    %899 = vmatpush1.xpose.msra.mxu0 0.0
    %900 = vmatprep.subr.mxu0 0.0
    %901 = vmatpush1.xpose.msra.mxu0 0.0
    %902 = vmatprep.subr.mxu0 0.0
    %903 = vmatpush1.xpose.msra.mxu0 0.0
    %904 = vmatprep.subr.mxu0 0.0
    %905 = vmatpush1.xpose.msra.mxu0 0.0
    %906 = vmatprep.subr.mxu0 0.0
    %907 = vmatpush1.xpose.msra.mxu0 0.0
    %908 = vmatprep.subr.mxu0 0.0
    %909 = vmatpush1.xpose.msra.mxu0 0.0
    %910 = vmatprep.subr.mxu0 0.0
    %911 = vmatpush1.xpose.msra.mxu0 0.0
    %912 = vmatprep.subr.mxu0 0.0
    %913 = vmatpush1.xpose.msra.mxu0 0.0
    %914 = vmatprep.mubr.f32.mxu0 0.0
    %915 = vmatmul.mubr.f32.gmra.mrb[0].mxu0 %v845
    %v916 = vpop.f32.mrb[0].mxu0
    %v917 = vadd.f32 0.0, %v916
    %v918 = vpop.f32.mrb[0].mxu0
    %919 = vmatprep.mubr.f32.mxu0 0.0
    %920 = vmatmul.mubr.f32.gmra.mrb[0].mxu0 %v848
    %v921 = vpop.f32.mrb[0].mxu0
    %v922 = vadd.f32 0.0, %v921
    %v923 = vpop.f32.mrb[0].mxu0
    %924 = vdwg.mxu0
    %926 = vset.pattern.permute.xlu0 0
    %927 = vperm.xlu0 %926, %v842
    %v928 = vpop.permute.xlu0 %927
    %931 = vset.pattern.permute.xlu0 0
    %932 = vperm.xlu0 %931, %v843
    %v933 = vpop.permute.xlu0 %932
    %v935 = vmul.f32 %v928, %v917
    %v936 = vmul.f32 %v933, %v922
    %vm937 = vcmp.le.f32.partialorder %v935, 0.0
    %vm938 = vcmp.le.f32.partialorder %v936, 0.0
    %v939 = vsel %vm937, %v928, 0.0
    %v940 = vsel %vm938, %v933, 0.0
    %941 = vxpose.xlu0.b32.start [1/16] %v939, 128
    %942 = vxpose.xlu0.b32.cont [2/16] %v940, 128
    %943 = vxpose.xlu0.b32.cont [3/16] 0.0, 128
    %944 = vxpose.xlu0.b32.cont [4/16] 0.0, 128
    %945 = vxpose.xlu0.b32.cont [5/16] 0.0, 128
    %946 = vxpose.xlu0.b32.cont [6/16] 0.0, 128
    %947 = vxpose.xlu0.b32.cont [7/16] 0.0, 128
    %948 = vxpose.xlu0.b32.cont [8/16] 0.0, 128
    %949 = vxpose.xlu0.b32.cont [9/16] 0.0, 128
    %950 = vxpose.xlu0.b32.cont [10/16] 0.0, 128
    %951 = vxpose.xlu0.b32.cont [11/16] 0.0, 128
    %952 = vxpose.xlu0.b32.cont [12/16] 0.0, 128
    %953 = vxpose.xlu0.b32.cont [13/16] 0.0, 128
    %954 = vxpose.xlu0.b32.cont [14/16] 0.0, 128
    %955 = vxpose.xlu0.b32.cont [15/16] 0.0, 128
    %956 = vxpose.xlu0.b32.end [16/16] 0.0, 128
    %v957 = vpop.trf.xlu0
    %v958 = vpop.trf.xlu0
    %v959 = vpop.trf.xlu0
    %v960 = vpop.trf.xlu0
    %v961 = vpop.trf.xlu0
    %v962 = vpop.trf.xlu0
    %v963 = vpop.trf.xlu0
    %v964 = vpop.trf.xlu0
    %v965 = vpop.trf.xlu0
    %v966 = vpop.trf.xlu0
    %v967 = vpop.trf.xlu0
    %v968 = vpop.trf.xlu0
    %v969 = vpop.trf.xlu0
    %v970 = vpop.trf.xlu0
    %v971 = vpop.trf.xlu0
    %v972 = vpop.trf.xlu0
    %v974 = vsel %vm195, %v957, 0
    %v977 = vsel %vm195, %v958, 0
    %979 = vmatprep.subr.mxu0 0.0
    %980 = vmatpush1.msra.mxu0 %v839
    %981 = vmatprep.subr.mxu0 0.0
    %982 = vmatpush1.msra.mxu0 %v840
    %983 = vmatprep.subr.mxu0 0.0
    %984 = vmatpush1.msra.mxu0 0.0
    %985 = vmatprep.subr.mxu0 0.0
    %986 = vmatpush1.msra.mxu0 0.0
    %987 = vmatprep.subr.mxu0 0.0
    %988 = vmatpush1.msra.mxu0 0.0
    %989 = vmatprep.subr.mxu0 0.0
    %990 = vmatpush1.msra.mxu0 0.0
    %991 = vmatprep.subr.mxu0 0.0
    %992 = vmatpush1.msra.mxu0 0.0
    %993 = vmatprep.subr.mxu0 0.0
    %994 = vmatpush1.msra.mxu0 0.0
    %995 = vmatprep.subr.mxu0 0.0
    %996 = vmatpush1.msra.mxu0 0.0
    %997 = vmatprep.subr.mxu0 0.0
    %998 = vmatpush1.msra.mxu0 0.0
    %999 = vmatprep.subr.mxu0 0.0
    %1000 = vmatpush1.msra.mxu0 0.0
    %1001 = vmatprep.subr.mxu0 0.0
    %1002 = vmatpush1.msra.mxu0 0.0
    %1003 = vmatprep.subr.mxu0 0.0
    %1004 = vmatpush1.msra.mxu0 0.0
    %1005 = vmatprep.subr.mxu0 0.0
    %1006 = vmatpush1.msra.mxu0 0.0
    %1007 = vmatprep.subr.mxu0 0.0
    %1008 = vmatpush1.msra.mxu0 0.0
    %1009 = vmatprep.subr.mxu0 0.0
    %1010 = vmatpush1.msra.mxu0 0.0
    %1011 = vmatprep.subr.mxu0 0.0
    %1012 = vmatpush1.msra.mxu0 0.0
    %1013 = vmatprep.subr.mxu0 0.0
    %1014 = vmatpush1.msra.mxu0 0.0
    %1015 = vmatprep.subr.mxu0 0.0
    %1016 = vmatpush1.msra.mxu0 0.0
    %1017 = vmatprep.subr.mxu0 0.0
    %1018 = vmatpush1.msra.mxu0 0.0
    %1019 = vmatprep.subr.mxu0 0.0
    %1020 = vmatpush1.msra.mxu0 0.0
    %1021 = vmatprep.subr.mxu0 0.0
    %1022 = vmatpush1.msra.mxu0 0.0
    %1023 = vmatprep.subr.mxu0 0.0
    %1024 = vmatpush1.msra.mxu0 0.0
    %1025 = vmatprep.subr.mxu0 0.0
    %1026 = vmatpush1.msra.mxu0 0.0
    %1027 = vmatprep.subr.mxu0 0.0
    %1028 = vmatpush1.msra.mxu0 0.0
    %1029 = vmatprep.subr.mxu0 0.0
    %1030 = vmatpush1.msra.mxu0 0.0
    %1031 = vmatprep.subr.mxu0 0.0
    %1032 = vmatpush1.msra.mxu0 0.0
    %1033 = vmatprep.subr.mxu0 0.0
    %1034 = vmatpush1.msra.mxu0 0.0
    %1035 = vmatprep.subr.mxu0 0.0
    %1036 = vmatpush1.msra.mxu0 0.0
    %1037 = vmatprep.subr.mxu0 0.0
    %1038 = vmatpush1.msra.mxu0 0.0
    %1039 = vmatprep.subr.mxu0 0.0
    %1040 = vmatpush1.msra.mxu0 0.0
    %1041 = vmatprep.subr.mxu0 0.0
    %1042 = vmatpush1.msra.mxu0 0.0
    %1043 = vmatprep.mubr.f32.mxu0 0.0
    %1044 = vmatmul.mubr.f32.gmra.mrb[0].mxu0 %v974
    %v1045 = vpop.f32.mrb[0].mxu0
    %v1046 = vadd.f32 0.0, %v1045
    %v1047 = vpop.f32.mrb[0].mxu0
    %1048 = vmatprep.mubr.f32.mxu0 0.0
    %1049 = vmatmul.mubr.f32.gmra.mrb[0].mxu0 %v977
    %v1050 = vpop.f32.mrb[0].mxu0
    %v1051 = vadd.f32 0.0, %v1050
    %v1052 = vpop.f32.mrb[0].mxu0
    %1053 = vdwg.mxu0
    %v1054 = vmul.f32 %v1046, %v709
    %v1055 = vmul.f32 %v1051, %v710
    %v1056 = vsel %vm59, %v1054, 0.0
    %1057 = vadd.xlane.f32.xlu0 %v1056
    %v1058 = vpop.xlane.xlu0 %1057
    %v1059 = vsel %vm59, %v1055, 0.0
    %1060 = vadd.xlane.f32.xlu0 %v1059
    %v1061 = vpop.xlane.xlu0 %1060
    %v1062 = vmul.f32 %v1058, %v709
    %v1063 = vmul.f32 %v1061, %v710
    %v1064 = vsub.f32 %v1046, %v1062
    %v1065 = vsub.f32 %v1051, %v1063
    %v1066 = vmul.f32 %v1064, 0.003125
    %v1067 = vmul.f32 %v1065, 0.003125
    %v1068 = vadd.f32 %v709, %v1066
    %v1069 = vadd.f32 %v710, %v1067
    %v1070 = vmul.f32 %v1068, %v1068
    %v1071 = vmul.f32 %v1069, %v1069
    %v1072 = vsel %vm59, %v1070, 0.0
    %1073 = vadd.xlane.f32.xlu0 %v1072
    %v1074 = vpop.xlane.xlu0 %1073
    %v1075 = vsel %vm59, %v1071, 0.0
    %1076 = vadd.xlane.f32.xlu0 %v1075
    %v1077 = vpop.xlane.xlu0 %1076
    %v1078 = vmax.f32 %v1074, 1e-12
    %v1079 = vmax.f32 %v1077, 1e-12
    %v1080 = vrsqrt.pop %v1078
    %v1081 = vrsqrt.pop %v1079
    %v1082 = vmul.f32 %v1068, %v1080
    %v1083 = vmul.f32 %v1069, %v1081
    %v1085 = vsel %vm59, %v1082, 0
    %v1088 = vsel %vm59, %v1083, 0
    %1090 = vmatprep.subr.mxu0 0.0
    %1091 = vmatpush1.xpose.msra.mxu0 %v314
    %1092 = vmatprep.subr.mxu0 0.0
    %1093 = vmatpush1.xpose.msra.mxu0 %v317
    %1094 = vmatprep.subr.mxu0 0.0
    %1095 = vmatpush1.xpose.msra.mxu0 %v320
    %1096 = vmatprep.subr.mxu0 0.0
    %1097 = vmatpush1.xpose.msra.mxu0 %v323
    %1098 = vmatprep.subr.mxu0 0.0
    %1099 = vmatpush1.xpose.msra.mxu0 %v326
    %1100 = vmatprep.subr.mxu0 0.0
    %1101 = vmatpush1.xpose.msra.mxu0 %v329
    %1102 = vmatprep.subr.mxu0 0.0
    %1103 = vmatpush1.xpose.msra.mxu0 %v332
    %1104 = vmatprep.subr.mxu0 0.0
    %1105 = vmatpush1.xpose.msra.mxu0 %v335
    %1106 = vmatprep.subr.mxu0 0.0
    %1107 = vmatpush1.xpose.msra.mxu0 0.0
    %1108 = vmatprep.subr.mxu0 0.0
    %1109 = vmatpush1.xpose.msra.mxu0 0.0
    %1110 = vmatprep.subr.mxu0 0.0
    %1111 = vmatpush1.xpose.msra.mxu0 0.0
    %1112 = vmatprep.subr.mxu0 0.0
    %1113 = vmatpush1.xpose.msra.mxu0 0.0
    %1114 = vmatprep.subr.mxu0 0.0
    %1115 = vmatpush1.xpose.msra.mxu0 0.0
    %1116 = vmatprep.subr.mxu0 0.0
    %1117 = vmatpush1.xpose.msra.mxu0 0.0
    %1118 = vmatprep.subr.mxu0 0.0
    %1119 = vmatpush1.xpose.msra.mxu0 0.0
    %1120 = vmatprep.subr.mxu0 0.0
    %1121 = vmatpush1.xpose.msra.mxu0 0.0
    %1122 = vmatprep.subr.mxu0 0.0
    %1123 = vmatpush1.xpose.msra.mxu0 0.0
    %1124 = vmatprep.subr.mxu0 0.0
    %1125 = vmatpush1.xpose.msra.mxu0 0.0
    %1126 = vmatprep.subr.mxu0 0.0
    %1127 = vmatpush1.xpose.msra.mxu0 0.0
    %1128 = vmatprep.subr.mxu0 0.0
    %1129 = vmatpush1.xpose.msra.mxu0 0.0
    %1130 = vmatprep.subr.mxu0 0.0
    %1131 = vmatpush1.xpose.msra.mxu0 0.0
    %1132 = vmatprep.subr.mxu0 0.0
    %1133 = vmatpush1.xpose.msra.mxu0 0.0
    %1134 = vmatprep.subr.mxu0 0.0
    %1135 = vmatpush1.xpose.msra.mxu0 0.0
    %1136 = vmatprep.subr.mxu0 0.0
    %1137 = vmatpush1.xpose.msra.mxu0 0.0
    %1138 = vmatprep.subr.mxu0 0.0
    %1139 = vmatpush1.xpose.msra.mxu0 0.0
    %1140 = vmatprep.subr.mxu0 0.0
    %1141 = vmatpush1.xpose.msra.mxu0 0.0
    %1142 = vmatprep.subr.mxu0 0.0
    %1143 = vmatpush1.xpose.msra.mxu0 0.0
    %1144 = vmatprep.subr.mxu0 0.0
    %1145 = vmatpush1.xpose.msra.mxu0 0.0
    %1146 = vmatprep.subr.mxu0 0.0
    %1147 = vmatpush1.xpose.msra.mxu0 0.0
    %1148 = vmatprep.subr.mxu0 0.0
    %1149 = vmatpush1.xpose.msra.mxu0 0.0
    %1150 = vmatprep.subr.mxu0 0.0
    %1151 = vmatpush1.xpose.msra.mxu0 0.0
    %1152 = vmatprep.subr.mxu0 0.0
    %1153 = vmatpush1.xpose.msra.mxu0 0.0
    %1154 = vmatprep.mubr.f32.mxu0 0.0
    %1155 = vmatmul.mubr.f32.gmra.mrb[0].mxu0 %v1085
    %v1156 = vpop.f32.mrb[0].mxu0
    %v1157 = vadd.f32 0.0, %v1156
    %v1158 = vpop.f32.mrb[0].mxu0
    %1159 = vmatprep.mubr.f32.mxu0 0.0
    %1160 = vmatmul.mubr.f32.gmra.mrb[0].mxu0 %v1088
    %v1161 = vpop.f32.mrb[0].mxu0
    %v1162 = vadd.f32 0.0, %v1161
    %v1163 = vpop.f32.mrb[0].mxu0
    %1164 = vdwg.mxu0
    %vm1165 = vcmp.gt.f32.partialorder %v1157, 0.0
    %vm1166 = vcmp.gt.f32.partialorder %v1162, 0.0
    %v1167 = vsel %vm1165, %v418, 0.0
    %v1168 = vsel %vm1166, %v418, 0.0
    %v1169 = vsel %vm422, %v1167, 0.0
    %1170 = vadd.xlane.f32.xlu0 %v1169
    %v1171 = vpop.xlane.xlu0 %1170
    %v1172 = vsel %vm422, %v1168, 0.0
    %1173 = vadd.xlane.f32.xlu0 %v1172
    %v1174 = vpop.xlane.xlu0 %1173
    %v1175 = vsel %vm1165, 1, 0
    %v1176 = vsel %vm1166, 1, 0
    %v1177 = vcvt.s32.f32 %v1175
    %v1178 = vcvt.s32.f32 %v1176
    %v1179 = vsel %vm422, %v1177, 0.0
    %1180 = vadd.xlane.f32.xlu0 %v1179
    %v1181 = vpop.xlane.xlu0 %1180
    %v1182 = vsel %vm422, %v1178, 0.0
    %1183 = vadd.xlane.f32.xlu0 %v1182
    %v1184 = vpop.xlane.xlu0 %1183
    %v1185 = vmax.f32 %v1181, 1.0
    %v1186 = vmax.f32 %v1184, 1.0
    %v1187 = vrcp.pop %v1185
    %v1188 = vrcp.pop %v1186
    %vm1189 = vcmp.gt.f32.partialorder %v1181, 0.0
    %vm1190 = vcmp.gt.f32.partialorder %v1184, 0.0
    %v1191 = vmul.f32 %v1171, %v1187
    %v1192 = vmul.f32 %v1174, %v1188
    %v1193 = vsel %vm1189, %v1191, 1.0
    %v1194 = vsel %vm1190, %v1192, 1.0
    %vm1195 = vcmp.lt.f32.partialorder %v1193, %v824
    %vm1196 = vcmp.lt.f32.partialorder %v1194, %v825
    %v1197 = vsel %vm1195, %v1193, %v824
    %v1198 = vsel %vm1196, %v1194, %v825
    %v1199 = vsel %vm1195, 1, 0
    %v1200 = vsel %vm1196, 1, 0
    %1201 = vset.pattern.permute.xlu0 0
    %1202 = vperm.xlu0 %1201, %v1199
    %v1203 = vpop.permute.xlu0 %1202
    %1204 = vset.pattern.permute.xlu0 0
    %1205 = vperm.xlu0 %1204, %v1200
    %v1206 = vpop.permute.xlu0 %1205
    %vm1207 = vcmp.eq.s32.totalorder %v1203, 1
    %vm1208 = vcmp.eq.s32.totalorder %v1206, 1
    %v1209 = vsel %vm1207, %v1082, %v836
    %v1210 = vsel %vm1208, %v1083, %v837
    %s1211 = scalar_lea.vmem %s0, 48
    %v1212 = vld [vmem:[%s1211] sm:$0xff]
    %v1213 = vld [vmem:[%s1211 + $0x8] sm:$0xff]
    %s1214 = scalar_lea.vmem %s1, 48
    %v1215 = vld [vmem:[%s1214] sm:$0xff]
    %v1216 = vld [vmem:[%s1214 + $0x8] sm:$0xff]
    %v1218 = vsel %vm59, %v1212, 0
    %v1221 = vsel %vm59, %v1213, 0
    %1223 = vmatprep.subr.mxu0 0.0
    %1224 = vmatpush1.xpose.msra.mxu0 %v1085
    %1225 = vmatprep.subr.mxu0 0.0
    %1226 = vmatpush1.xpose.msra.mxu0 %v1088
    %1227 = vmatprep.subr.mxu0 0.0
    %1228 = vmatpush1.xpose.msra.mxu0 0.0
    %1229 = vmatprep.subr.mxu0 0.0
    %1230 = vmatpush1.xpose.msra.mxu0 0.0
    %1231 = vmatprep.subr.mxu0 0.0
    %1232 = vmatpush1.xpose.msra.mxu0 0.0
    %1233 = vmatprep.subr.mxu0 0.0
    %1234 = vmatpush1.xpose.msra.mxu0 0.0
    %1235 = vmatprep.subr.mxu0 0.0
    %1236 = vmatpush1.xpose.msra.mxu0 0.0
    %1237 = vmatprep.subr.mxu0 0.0
    %1238 = vmatpush1.xpose.msra.mxu0 0.0
    %1239 = vmatprep.subr.mxu0 0.0
    %1240 = vmatpush1.xpose.msra.mxu0 0.0
    %1241 = vmatprep.subr.mxu0 0.0
    %1242 = vmatpush1.xpose.msra.mxu0 0.0
    %1243 = vmatprep.subr.mxu0 0.0
    %1244 = vmatpush1.xpose.msra.mxu0 0.0
    %1245 = vmatprep.subr.mxu0 0.0
    %1246 = vmatpush1.xpose.msra.mxu0 0.0
    %1247 = vmatprep.subr.mxu0 0.0
    %1248 = vmatpush1.xpose.msra.mxu0 0.0
    %1249 = vmatprep.subr.mxu0 0.0
    %1250 = vmatpush1.xpose.msra.mxu0 0.0
    %1251 = vmatprep.subr.mxu0 0.0
    %1252 = vmatpush1.xpose.msra.mxu0 0.0
    %1253 = vmatprep.subr.mxu0 0.0
    %1254 = vmatpush1.xpose.msra.mxu0 0.0
    %1255 = vmatprep.subr.mxu0 0.0
    %1256 = vmatpush1.xpose.msra.mxu0 0.0
    %1257 = vmatprep.subr.mxu0 0.0
    %1258 = vmatpush1.xpose.msra.mxu0 0.0
    %1259 = vmatprep.subr.mxu0 0.0
    %1260 = vmatpush1.xpose.msra.mxu0 0.0
    %1261 = vmatprep.subr.mxu0 0.0
    %1262 = vmatpush1.xpose.msra.mxu0 0.0
    %1263 = vmatprep.subr.mxu0 0.0
    %1264 = vmatpush1.xpose.msra.mxu0 0.0
    %1265 = vmatprep.subr.mxu0 0.0
    %1266 = vmatpush1.xpose.msra.mxu0 0.0
    %1267 = vmatprep.subr.mxu0 0.0
    %1268 = vmatpush1.xpose.msra.mxu0 0.0
    %1269 = vmatprep.subr.mxu0 0.0
    %1270 = vmatpush1.xpose.msra.mxu0 0.0
    %1271 = vmatprep.subr.mxu0 0.0
    %1272 = vmatpush1.xpose.msra.mxu0 0.0
    %1273 = vmatprep.subr.mxu0 0.0
    %1274 = vmatpush1.xpose.msra.mxu0 0.0
    %1275 = vmatprep.subr.mxu0 0.0
    %1276 = vmatpush1.xpose.msra.mxu0 0.0
    %1277 = vmatprep.subr.mxu0 0.0
    %1278 = vmatpush1.xpose.msra.mxu0 0.0
    %1279 = vmatprep.subr.mxu0 0.0
    %1280 = vmatpush1.xpose.msra.mxu0 0.0
    %1281 = vmatprep.subr.mxu0 0.0
    %1282 = vmatpush1.xpose.msra.mxu0 0.0
    %1283 = vmatprep.subr.mxu0 0.0
    %1284 = vmatpush1.xpose.msra.mxu0 0.0
    %1285 = vmatprep.subr.mxu0 0.0
    %1286 = vmatpush1.xpose.msra.mxu0 0.0
    %1287 = vmatprep.mubr.f32.mxu0 0.0
    %1288 = vmatmul.mubr.f32.gmra.mrb[0].mxu0 %v1218
    %v1289 = vpop.f32.mrb[0].mxu0
    %v1290 = vadd.f32 0.0, %v1289
    %v1291 = vpop.f32.mrb[0].mxu0
    %1292 = vmatprep.mubr.f32.mxu0 0.0
    %1293 = vmatmul.mubr.f32.gmra.mrb[0].mxu0 %v1221
    %v1294 = vpop.f32.mrb[0].mxu0
    %v1295 = vadd.f32 0.0, %v1294
    %v1296 = vpop.f32.mrb[0].mxu0
    %1297 = vdwg.mxu0
    %1299 = vset.pattern.permute.xlu0 0
    %1300 = vperm.xlu0 %1299, %v1215
    %v1301 = vpop.permute.xlu0 %1300
    %1304 = vset.pattern.permute.xlu0 0
    %1305 = vperm.xlu0 %1304, %v1216
    %v1306 = vpop.permute.xlu0 %1305
    %v1308 = vmul.f32 %v1301, %v1290
    %v1309 = vmul.f32 %v1306, %v1295
    %vm1310 = vcmp.le.f32.partialorder %v1308, 0.0
    %vm1311 = vcmp.le.f32.partialorder %v1309, 0.0
    %v1312 = vsel %vm1310, %v1301, 0.0
    %v1313 = vsel %vm1311, %v1306, 0.0
    %1314 = vxpose.xlu0.b32.start [1/16] %v1312, 128
    %1315 = vxpose.xlu0.b32.cont [2/16] %v1313, 128
    %1316 = vxpose.xlu0.b32.cont [3/16] 0.0, 128
    %1317 = vxpose.xlu0.b32.cont [4/16] 0.0, 128
    %1318 = vxpose.xlu0.b32.cont [5/16] 0.0, 128
    %1319 = vxpose.xlu0.b32.cont [6/16] 0.0, 128
    %1320 = vxpose.xlu0.b32.cont [7/16] 0.0, 128
    %1321 = vxpose.xlu0.b32.cont [8/16] 0.0, 128
    %1322 = vxpose.xlu0.b32.cont [9/16] 0.0, 128
    %1323 = vxpose.xlu0.b32.cont [10/16] 0.0, 128
    %1324 = vxpose.xlu0.b32.cont [11/16] 0.0, 128
    %1325 = vxpose.xlu0.b32.cont [12/16] 0.0, 128
    %1326 = vxpose.xlu0.b32.cont [13/16] 0.0, 128
    %1327 = vxpose.xlu0.b32.cont [14/16] 0.0, 128
    %1328 = vxpose.xlu0.b32.cont [15/16] 0.0, 128
    %1329 = vxpose.xlu0.b32.end [16/16] 0.0, 128
    %v1330 = vpop.trf.xlu0
    %v1331 = vpop.trf.xlu0
    %v1332 = vpop.trf.xlu0
    %v1333 = vpop.trf.xlu0
    %v1334 = vpop.trf.xlu0
    %v1335 = vpop.trf.xlu0
    %v1336 = vpop.trf.xlu0
    %v1337 = vpop.trf.xlu0
    %v1338 = vpop.trf.xlu0
    %v1339 = vpop.trf.xlu0
    %v1340 = vpop.trf.xlu0
    %v1341 = vpop.trf.xlu0
    %v1342 = vpop.trf.xlu0
    %v1343 = vpop.trf.xlu0
    %v1344 = vpop.trf.xlu0
    %v1345 = vpop.trf.xlu0
    %v1347 = vsel %vm195, %v1330, 0
    %v1350 = vsel %vm195, %v1331, 0
    %1352 = vmatprep.subr.mxu0 0.0
    %1353 = vmatpush1.msra.mxu0 %v1212
    %1354 = vmatprep.subr.mxu0 0.0
    %1355 = vmatpush1.msra.mxu0 %v1213
    %1356 = vmatprep.subr.mxu0 0.0
    %1357 = vmatpush1.msra.mxu0 0.0
    %1358 = vmatprep.subr.mxu0 0.0
    %1359 = vmatpush1.msra.mxu0 0.0
    %1360 = vmatprep.subr.mxu0 0.0
    %1361 = vmatpush1.msra.mxu0 0.0
    %1362 = vmatprep.subr.mxu0 0.0
    %1363 = vmatpush1.msra.mxu0 0.0
    %1364 = vmatprep.subr.mxu0 0.0
    %1365 = vmatpush1.msra.mxu0 0.0
    %1366 = vmatprep.subr.mxu0 0.0
    %1367 = vmatpush1.msra.mxu0 0.0
    %1368 = vmatprep.subr.mxu0 0.0
    %1369 = vmatpush1.msra.mxu0 0.0
    %1370 = vmatprep.subr.mxu0 0.0
    %1371 = vmatpush1.msra.mxu0 0.0
    %1372 = vmatprep.subr.mxu0 0.0
    %1373 = vmatpush1.msra.mxu0 0.0
    %1374 = vmatprep.subr.mxu0 0.0
    %1375 = vmatpush1.msra.mxu0 0.0
    %1376 = vmatprep.subr.mxu0 0.0
    %1377 = vmatpush1.msra.mxu0 0.0
    %1378 = vmatprep.subr.mxu0 0.0
    %1379 = vmatpush1.msra.mxu0 0.0
    %1380 = vmatprep.subr.mxu0 0.0
    %1381 = vmatpush1.msra.mxu0 0.0
    %1382 = vmatprep.subr.mxu0 0.0
    %1383 = vmatpush1.msra.mxu0 0.0
    %1384 = vmatprep.subr.mxu0 0.0
    %1385 = vmatpush1.msra.mxu0 0.0
    %1386 = vmatprep.subr.mxu0 0.0
    %1387 = vmatpush1.msra.mxu0 0.0
    %1388 = vmatprep.subr.mxu0 0.0
    %1389 = vmatpush1.msra.mxu0 0.0
    %1390 = vmatprep.subr.mxu0 0.0
    %1391 = vmatpush1.msra.mxu0 0.0
    %1392 = vmatprep.subr.mxu0 0.0
    %1393 = vmatpush1.msra.mxu0 0.0
    %1394 = vmatprep.subr.mxu0 0.0
    %1395 = vmatpush1.msra.mxu0 0.0
    %1396 = vmatprep.subr.mxu0 0.0
    %1397 = vmatpush1.msra.mxu0 0.0
    %1398 = vmatprep.subr.mxu0 0.0
    %1399 = vmatpush1.msra.mxu0 0.0
    %1400 = vmatprep.subr.mxu0 0.0
    %1401 = vmatpush1.msra.mxu0 0.0
    %1402 = vmatprep.subr.mxu0 0.0
    %1403 = vmatpush1.msra.mxu0 0.0
    %1404 = vmatprep.subr.mxu0 0.0
    %1405 = vmatpush1.msra.mxu0 0.0
    %1406 = vmatprep.subr.mxu0 0.0
    %1407 = vmatpush1.msra.mxu0 0.0
    %1408 = vmatprep.subr.mxu0 0.0
    %1409 = vmatpush1.msra.mxu0 0.0
    %1410 = vmatprep.subr.mxu0 0.0
    %1411 = vmatpush1.msra.mxu0 0.0
    %1412 = vmatprep.subr.mxu0 0.0
    %1413 = vmatpush1.msra.mxu0 0.0
    %1414 = vmatprep.subr.mxu0 0.0
    %1415 = vmatpush1.msra.mxu0 0.0
    %1416 = vmatprep.mubr.f32.mxu0 0.0
    %1417 = vmatmul.mubr.f32.gmra.mrb[0].mxu0 %v1347
    %v1418 = vpop.f32.mrb[0].mxu0
    %v1419 = vadd.f32 0.0, %v1418
    %v1420 = vpop.f32.mrb[0].mxu0
    %1421 = vmatprep.mubr.f32.mxu0 0.0
    %1422 = vmatmul.mubr.f32.gmra.mrb[0].mxu0 %v1350
    %v1423 = vpop.f32.mrb[0].mxu0
    %v1424 = vadd.f32 0.0, %v1423
    %v1425 = vpop.f32.mrb[0].mxu0
    %1426 = vdwg.mxu0
    %v1427 = vmul.f32 %v1419, %v1082
    %v1428 = vmul.f32 %v1424, %v1083
    %v1429 = vsel %vm59, %v1427, 0.0
    %1430 = vadd.xlane.f32.xlu0 %v1429
    %v1431 = vpop.xlane.xlu0 %1430
    %v1432 = vsel %vm59, %v1428, 0.0
    %1433 = vadd.xlane.f32.xlu0 %v1432
    %v1434 = vpop.xlane.xlu0 %1433
    %v1435 = vmul.f32 %v1431, %v1082
    %v1436 = vmul.f32 %v1434, %v1083
    %v1437 = vsub.f32 %v1419, %v1435
    %v1438 = vsub.f32 %v1424, %v1436
    %v1439 = vmul.f32 %v1437, 0.003125
    %v1440 = vmul.f32 %v1438, 0.003125
    %v1441 = vadd.f32 %v1082, %v1439
    %v1442 = vadd.f32 %v1083, %v1440
    %v1443 = vmul.f32 %v1441, %v1441
    %v1444 = vmul.f32 %v1442, %v1442
    %v1445 = vsel %vm59, %v1443, 0.0
    %1446 = vadd.xlane.f32.xlu0 %v1445
    %v1447 = vpop.xlane.xlu0 %1446
    %v1448 = vsel %vm59, %v1444, 0.0
    %1449 = vadd.xlane.f32.xlu0 %v1448
    %v1450 = vpop.xlane.xlu0 %1449
    %v1451 = vmax.f32 %v1447, 1e-12
    %v1452 = vmax.f32 %v1450, 1e-12
    %v1453 = vrsqrt.pop %v1451
    %v1454 = vrsqrt.pop %v1452
    %v1455 = vmul.f32 %v1441, %v1453
    %v1456 = vmul.f32 %v1442, %v1454
    %v1458 = vsel %vm59, %v1455, 0
    %v1461 = vsel %vm59, %v1456, 0
    %1463 = vmatprep.subr.mxu0 0.0
    %1464 = vmatpush1.xpose.msra.mxu0 %v314
    %1465 = vmatprep.subr.mxu0 0.0
    %1466 = vmatpush1.xpose.msra.mxu0 %v317
    %1467 = vmatprep.subr.mxu0 0.0
    %1468 = vmatpush1.xpose.msra.mxu0 %v320
    %1469 = vmatprep.subr.mxu0 0.0
    %1470 = vmatpush1.xpose.msra.mxu0 %v323
    %1471 = vmatprep.subr.mxu0 0.0
    %1472 = vmatpush1.xpose.msra.mxu0 %v326
    %1473 = vmatprep.subr.mxu0 0.0
    %1474 = vmatpush1.xpose.msra.mxu0 %v329
    %1475 = vmatprep.subr.mxu0 0.0
    %1476 = vmatpush1.xpose.msra.mxu0 %v332
    %1477 = vmatprep.subr.mxu0 0.0
    %1478 = vmatpush1.xpose.msra.mxu0 %v335
    %1479 = vmatprep.subr.mxu0 0.0
    %1480 = vmatpush1.xpose.msra.mxu0 0.0
    %1481 = vmatprep.subr.mxu0 0.0
    %1482 = vmatpush1.xpose.msra.mxu0 0.0
    %1483 = vmatprep.subr.mxu0 0.0
    %1484 = vmatpush1.xpose.msra.mxu0 0.0
    %1485 = vmatprep.subr.mxu0 0.0
    %1486 = vmatpush1.xpose.msra.mxu0 0.0
    %1487 = vmatprep.subr.mxu0 0.0
    %1488 = vmatpush1.xpose.msra.mxu0 0.0
    %1489 = vmatprep.subr.mxu0 0.0
    %1490 = vmatpush1.xpose.msra.mxu0 0.0
    %1491 = vmatprep.subr.mxu0 0.0
    %1492 = vmatpush1.xpose.msra.mxu0 0.0
    %1493 = vmatprep.subr.mxu0 0.0
    %1494 = vmatpush1.xpose.msra.mxu0 0.0
    %1495 = vmatprep.subr.mxu0 0.0
    %1496 = vmatpush1.xpose.msra.mxu0 0.0
    %1497 = vmatprep.subr.mxu0 0.0
    %1498 = vmatpush1.xpose.msra.mxu0 0.0
    %1499 = vmatprep.subr.mxu0 0.0
    %1500 = vmatpush1.xpose.msra.mxu0 0.0
    %1501 = vmatprep.subr.mxu0 0.0
    %1502 = vmatpush1.xpose.msra.mxu0 0.0
    %1503 = vmatprep.subr.mxu0 0.0
    %1504 = vmatpush1.xpose.msra.mxu0 0.0
    %1505 = vmatprep.subr.mxu0 0.0
    %1506 = vmatpush1.xpose.msra.mxu0 0.0
    %1507 = vmatprep.subr.mxu0 0.0
    %1508 = vmatpush1.xpose.msra.mxu0 0.0
    %1509 = vmatprep.subr.mxu0 0.0
    %1510 = vmatpush1.xpose.msra.mxu0 0.0
    %1511 = vmatprep.subr.mxu0 0.0
    %1512 = vmatpush1.xpose.msra.mxu0 0.0
    %1513 = vmatprep.subr.mxu0 0.0
    %1514 = vmatpush1.xpose.msra.mxu0 0.0
    %1515 = vmatprep.subr.mxu0 0.0
    %1516 = vmatpush1.xpose.msra.mxu0 0.0
    %1517 = vmatprep.subr.mxu0 0.0
    %1518 = vmatpush1.xpose.msra.mxu0 0.0
    %1519 = vmatprep.subr.mxu0 0.0
    %1520 = vmatpush1.xpose.msra.mxu0 0.0
    %1521 = vmatprep.subr.mxu0 0.0
    %1522 = vmatpush1.xpose.msra.mxu0 0.0
    %1523 = vmatprep.subr.mxu0 0.0
    %1524 = vmatpush1.xpose.msra.mxu0 0.0
    %1525 = vmatprep.subr.mxu0 0.0
    %1526 = vmatpush1.xpose.msra.mxu0 0.0
    %1527 = vmatprep.mubr.f32.mxu0 0.0
    %1528 = vmatmul.mubr.f32.gmra.mrb[0].mxu0 %v1458
    %v1529 = vpop.f32.mrb[0].mxu0
    %v1530 = vadd.f32 0.0, %v1529
    %v1531 = vpop.f32.mrb[0].mxu0
    %1532 = vmatprep.mubr.f32.mxu0 0.0
    %1533 = vmatmul.mubr.f32.gmra.mrb[0].mxu0 %v1461
    %v1534 = vpop.f32.mrb[0].mxu0
    %v1535 = vadd.f32 0.0, %v1534
    %v1536 = vpop.f32.mrb[0].mxu0
    %1537 = vdwg.mxu0
    %vm1538 = vcmp.gt.f32.partialorder %v1530, 0.0
    %vm1539 = vcmp.gt.f32.partialorder %v1535, 0.0
    %v1540 = vsel %vm1538, %v418, 0.0
    %v1541 = vsel %vm1539, %v418, 0.0
    %v1542 = vsel %vm422, %v1540, 0.0
    %1543 = vadd.xlane.f32.xlu0 %v1542
    %v1544 = vpop.xlane.xlu0 %1543
    %v1545 = vsel %vm422, %v1541, 0.0
    %1546 = vadd.xlane.f32.xlu0 %v1545
    %v1547 = vpop.xlane.xlu0 %1546
    %v1548 = vsel %vm1538, 1, 0
    %v1549 = vsel %vm1539, 1, 0
    %v1550 = vcvt.s32.f32 %v1548
    %v1551 = vcvt.s32.f32 %v1549
    %v1552 = vsel %vm422, %v1550, 0.0
    %1553 = vadd.xlane.f32.xlu0 %v1552
    %v1554 = vpop.xlane.xlu0 %1553
    %v1555 = vsel %vm422, %v1551, 0.0
    %1556 = vadd.xlane.f32.xlu0 %v1555
    %v1557 = vpop.xlane.xlu0 %1556
    %v1558 = vmax.f32 %v1554, 1.0
    %v1559 = vmax.f32 %v1557, 1.0
    %v1560 = vrcp.pop %v1558
    %v1561 = vrcp.pop %v1559
    %vm1562 = vcmp.gt.f32.partialorder %v1554, 0.0
    %vm1563 = vcmp.gt.f32.partialorder %v1557, 0.0
    %v1564 = vmul.f32 %v1544, %v1560
    %v1565 = vmul.f32 %v1547, %v1561
    %v1566 = vsel %vm1562, %v1564, 1.0
    %v1567 = vsel %vm1563, %v1565, 1.0
    %vm1568 = vcmp.lt.f32.partialorder %v1566, %v1197
    %vm1569 = vcmp.lt.f32.partialorder %v1567, %v1198
    %v1570 = vsel %vm1568, %v1566, %v1197
    %v1571 = vsel %vm1569, %v1567, %v1198
    %v1572 = vsel %vm1568, 1, 0
    %v1573 = vsel %vm1569, 1, 0
    %1574 = vset.pattern.permute.xlu0 0
    %1575 = vperm.xlu0 %1574, %v1572
    %v1576 = vpop.permute.xlu0 %1575
    %1577 = vset.pattern.permute.xlu0 0
    %1578 = vperm.xlu0 %1577, %v1573
    %v1579 = vpop.permute.xlu0 %1578
    %vm1580 = vcmp.eq.s32.totalorder %v1576, 1
    %vm1581 = vcmp.eq.s32.totalorder %v1579, 1
    %v1582 = vsel %vm1580, %v1455, %v1209
    %v1583 = vsel %vm1581, %v1456, %v1210
    %1584 = vst.msk [vmem:[#allocation2] sm:$0xff] %vm59, %v1455
    %1585 = vst.msk [vmem:[#allocation2 + $0x8] sm:$0xff] %vm59, %v1456
    %vm1586 = vcmask 7168
    %1587 = vst.msk [vmem:[#allocation3] sm:$0xff] %vm1586, %v1570
    %1588 = vst.msk [vmem:[#allocation3 + $0x8] sm:$0xff] %vm1586, %v1571
    %1589 = vst.msk [vmem:[#allocation4] sm:$0xff] %vm59, %v1582
    %1590 = vst.msk [vmem:[#allocation4 + $0x8] sm:$0xff] %vm59, %v1583
    // Predicated region
    $region26: #{tpu_custom_call.1} parent=1 // pred_check
      %p1591 = pneg %p23
    $region27: #{tpu_custom_call.1} parent=1 // pred_check_branch
      %1593 = sbr.rel (%p1591) target = $region29
    $region28: #{tpu_custom_call.1} parent=1 // pred_region
      %v1594 = vld [vmem:[#allocation3] sm:$0xff]
      %v1595 = vld [vmem:[#allocation3 + $0x8] sm:$0xff]
      %v1596 = vld [vmem:[#allocation4] sm:$0xff]
      %v1597 = vld [vmem:[#allocation4 + $0x8] sm:$0xff]
      %vm1598 = vcmp.lt.f32.partialorder %v1594, %v1595
      %v1599 = vsel %vm1598, %v1594, %v1595
      %1600 = vst.msk [vmem:[%s6] sm:$0xff] %vm1586, %v1599
      %v1601 = vsel %vm1598, 1, 0
      %1602 = vset.pattern.permute.xlu0 0
      %1603 = vperm.xlu0 %1602, %v1601
      %v1604 = vpop.permute.xlu0 %1603
      %vm1605 = vcmp.eq.s32.totalorder %v1604, 1
      %v1606 = vsel %vm1605, %v1596, %v1597
      %1607 = vst.msk [vmem:[#allocation5] sm:$0xff] %vm59, %v1606
    $region29: #{tpu_custom_call.1} parent=1 // pred_fallthru
      _
    // Predicated region
    $region30: #{tpu_custom_call.1} parent=1 // pred_check
      _
    $region31: #{tpu_custom_call.1} parent=1 // pred_check_branch
      %1609 = sbr.rel (0) target = $region33
    $region32: #{tpu_custom_call.1} parent=1 // pred_region
      %s1611 = ssub.s32 128, 128
      %1612 = vsyncadd [#allocation6], %s1611
      %s1614 = sshll.u32 [#allocation5], 4
      %s1615 = int_to_ptr.vmem [resolvable:$true] %s1614
      %1617 = dma.vmem_to_hbm [thread:$0]  %s1615, 128, %s5, [#allocation6]
    $region33: #{tpu_custom_call.1} parent=1 // pred_fallthru
      _
    // Predicated region
    $region34: #{tpu_custom_call.1} parent=1 // pred_check
      _
    $region35: #{tpu_custom_call.1} parent=1 // pred_check_branch
      %1619 = sbr.rel (0) target = $region37
    $region36: #{tpu_custom_call.1} parent=1 // pred_region
      _
    $region37: #{tpu_custom_call.1} parent=1 // pred_fallthru
      _
    // Predicated region
    $region38: #{tpu_custom_call.1} parent=1 // pred_check
      _
    $region39: #{tpu_custom_call.1} parent=1 // pred_check_branch
      %1621 = sbr.rel (0) target = $region41
    $region40: #{tpu_custom_call.1} parent=1 // pred_region
      %1622 = dma.done [#allocation6], 128
    $region41: #{tpu_custom_call.1} parent=1 // pred_fallthru
      _
    // Predicated region
    $region42: #{tpu_custom_call.1} parent=1 // pred_check
      _
    $region43: #{tpu_custom_call.1} parent=1 // pred_check_branch
      %1624 = sbr.rel (0) target = $region45
    $region44: #{tpu_custom_call.1} parent=1 // pred_region
      _
    $region45: #{tpu_custom_call.1} parent=1 // pred_fallthru
      _
    %1625 = vsyncpa [#allocation6], 1

</llo_original>
